<compile_context>
chip_gen: v7x
topology: tpu7x:2x2x1
jax: 0.10.0
libtpu: 0.0.40
codegen_flags: <defaults>
</compile_context>

<pallas_src>
import functools

import numpy as np

import jax
import jax.numpy as jnp
from jax.experimental import pallas as pl
from jax.experimental.pallas import tpu as pltpu

K = 3  # MaxPool2d(kernel_size=3): stride defaults to 3 -> non-overlapping windows


def _maxpool_kernel(s_ref, x_ref, o1_ref, o2_ref, *, h_img):
    # s_ref : (K, W, WO_C)    one-hot column-gather matrices (f32), one per kw tap
    # x_ref : (TN, RB, W)     RB = 3*TH (row-tiled) or the full image height H
    # o1_ref: (TN, TH , WO_C) ceil_mode=True rows of this block
    # o2_ref: (TN, THF, WO_F) ceil_mode=False rows (pure slice of the ceil result)
    tn, rb, w = x_ref.shape
    th, wo_c = o1_ref.shape[1], o1_ref.shape[2]
    th_f, wo_f = o2_ref.shape[1], o2_ref.shape[2]
    dt = x_ref.dtype
    neg = float(jnp.finfo(dt).min)
    row0 = pl.program_id(1) * rb  # first input row covered by this block

    # ---- pool over H: three kh taps, each a sublane-strided slice of the input block ----
    taps = []
    for kh in range(K):
        n_load = min(th, -(-(rb - kh) // K))          # rows of this tap present in the block
        t = x_ref[:, pl.ds(kh, n_load, stride=K), :]  # (tn, n_load, w)
        if n_load < th:                               # bottom ceil windows: missing rows -> pad
            t = jnp.concatenate(
                [t, jnp.full((tn, th - n_load, w), neg, dt)], axis=1)
        # rows at/after the true image height are ceil_mode padding or ragged-block garbage
        ids = jax.lax.broadcasted_iota(jnp.int32, (th, w), 0)
        t = jnp.where(row0 + ids * K + kh < h_img, t, neg)
        taps.append(t)
    hmax = jnp.maximum(jnp.maximum(taps[0], taps[1]), taps[2]).astype(jnp.float32)

    # pad rows to a multiple of 8 so the (tn, th) -> tn*th merge below is tile-aligned (free)
    thp = -(-th // 8) * 8
    if thp != th:
        hmax = jnp.concatenate(
            [hmax, jnp.full((tn, thp - th, w), neg, jnp.float32)], axis=1)
    h2 = hmax.reshape(tn * thp, w)

    # ---- pool over W: gather columns 3j+kw via one-hot matmuls (idle MXU), then max ----
    # out-of-range taps of the last (partial) ceil window re-select column 3j, so no W pad.
    out = None
    for kw in range(K):
        g = jnp.dot(h2, s_ref[kw],
                    precision=jax.lax.Precision.HIGHEST,
                    preferred_element_type=jnp.float32)  # (tn*thp, wo_c)
        out = g if out is None else jnp.maximum(out, g)
    out = out.reshape(tn, thp, wo_c).astype(o1_ref.dtype)

    o1_ref[...] = out[:, :th, :]
    o2_ref[...] = out[:, :th_f, :wo_f]  # floor-mode == interior of the ceil-mode result


def _gather_matrices(w_in, wo_c):
    """S[kw, w, j] = 1 where w is the column feeding output column j for tap kw."""
    s = np.zeros((K, w_in, wo_c), np.float32)
    for kw in range(K):
        for j in range(wo_c):
            col = j * K + kw
            s[kw, col if col < w_in else j * K, j] = 1.0
    return jnp.asarray(s)


def _hw_budget():
    try:
        kind = jax.devices()[0].device_kind.lower()
    except Exception:
        kind = ""
    if "v5" in kind or "v6" in kind:            # 128 MiB physical VMEM
        return 16 * 1024 * 1024, 64 * 1024 * 1024
    return 8 * 1024 * 1024, 32 * 1024 * 1024    # v7x (64 MiB VMEM) / unknown: conservative


def _plan_tiles(n, h, w, ho_c, ho_f, itemsize, target_bytes):
    """Pick row/channel tiles: returns (row_block, th1, th2, tn)."""
    def o2_ok(th):
        gi = -(-ho_c // th)
        return gi == 1 or ho_f == ho_c or (gi - 1) * th < ho_f

    single = ho_c <= 8
    th = ho_c if single else 8
    if not single:
        # grow the row tile while a full-channel block still fits the byte target
        while th + 8 < ho_c and n * K * (th + 8) * w * itemsize <= target_bytes:
            th += 8
        # never let the last row block be fully out of range for the floor-mode output
        while th < ho_c and not o2_ok(th):
            th += 8
        if th >= ho_c:
            single = True
    if single:
        rb, th1, th2 = h, ho_c, ho_f
    else:
        rb, th1, th2 = K * th, th, th
    tn = int(min(n, max(1, target_bytes // (rb * w * itemsize))))
    return rb, th1, th2, tn


def maxpool2d_both(x_nchw):
    """Returns (MaxPool2d(3, ceil_mode=True)(x), MaxPool2d(3, ceil_mode=False)(x)), NCHW."""
    B, C, H, W = x_nchw.shape
    assert H >= K and W >= K, "input smaller than the pooling kernel"
    ho_c, wo_c = -(-(H - K) // K) + 1, -(-(W - K) // K) + 1   # ceil_mode=True
    ho_f, wo_f = (H - K) // K + 1, (W - K) // K + 1           # ceil_mode=False
    N = B * C
    itemsize = x_nchw.dtype.itemsize

    x = x_nchw.reshape(N, H, W)              # leading-dim merge only: layout-free, no HBM pass
    s = _gather_matrices(W, wo_c)

    target_bytes, vmem_limit = _hw_budget()
    rb, th1, th2, tn = _plan_tiles(N, H, W, ho_c, ho_f, itemsize, target_bytes)
    gi = -(-ho_c // th1)
    gn = -(-N // tn)
    if gn * gi == 1 and N > 1:               # keep >= 2 blocks so dual-TC chips get fed
        tn = -(-N // 2)
        gn = -(-N // tn)

    out1_e, out2_e = N * ho_c * wo_c, N * ho_f * wo_f
    o1, o2 = pl.pallas_call(
        functools.partial(_maxpool_kernel, h_img=H),
        out_shape=(jax.ShapeDtypeStruct((N, ho_c, wo_c), x.dtype),
                   jax.ShapeDtypeStruct((N, ho_f, wo_f), x.dtype)),
        grid=(gn, gi),
        in_specs=[pl.BlockSpec((K, W, wo_c), lambda n, i: (0, 0, 0)),
                  pl.BlockSpec((tn, rb, W), lambda n, i: (n, i, 0))],
        out_specs=(pl.BlockSpec((tn, th1, wo_c), lambda n, i: (n, i, 0)),
                   pl.BlockSpec((tn, th2, wo_f), lambda n, i: (n, i, 0))),
        compiler_params=pltpu.CompilerParams(
            dimension_semantics=("parallel", "parallel"),
            vmem_limit_bytes=vmem_limit),
        cost_estimate=pl.CostEstimate(
            flops=9 * out1_e + 2 * K * N * ho_c * W * wo_c,
            transcendentals=0,
            bytes_accessed=(x.size + out1_e + out2_e) * itemsize + s.size * 4),
    )(s, x)

    return o1.reshape(B, C, ho_c, wo_c), o2.reshape(B, C, ho_f, wo_f)


def _ref_maxpool(x_nchw, out_h, out_w):
    B, C, H, W = x_nchw.shape
    res = jnp.full((B, C, out_h, out_w), jnp.finfo(x_nchw.dtype).min, x_nchw.dtype)
    for oh in range(out_h):
        for ow in range(out_w):
            hs, ws = oh * K, ow * K
            win = x_nchw[:, :, hs:min(hs + K, H), ws:min(ws + K, W)]
            res = res.at[:, :, oh, ow].set(win.max(axis=(2, 3)))
    return res


if __name__ == "__main__":
    key = jax.random.PRNGKey(0)
    B, C, H, W = 2, 4, 16, 16
    x = jax.random.normal(key, (B, C, H, W), dtype=jnp.float32)

    out1, out2 = jax.jit(maxpool2d_both)(x)
    out1 = jax.block_until_ready(out1)
    out2 = jax.block_until_ready(out2)

    # Check against a pure-JAX reference of PyTorch MaxPool2d semantics.
    ref1 = _ref_maxpool(x, out1.shape[2], out1.shape[3])  # ceil_mode=True  -> (2,4,6,6)
    ref2 = _ref_maxpool(x, out2.shape[2], out2.shape[3])  # ceil_mode=False -> (2,4,5,5)
    assert out1.shape == (B, C, 6, 6) and out2.shape == (B, C, 5, 5)
    assert jnp.allclose(out1, ref1, rtol=1e-5, atol=1e-5)
    assert jnp.allclose(out2, ref2, rtol=1e-5, atol=1e-5)

    print("KERNEL_OK")
</pallas_src>

<mosaic_0001>
module attributes {stable_mosaic.version = 11 : i64} {
  func.func @_maxpool_kernel(%arg0: i32, %arg1: i32, %arg2: memref<3x16x6xf32, #tpu.memory_space<vmem>>, %arg3: memref<4x16x16xf32, #tpu.memory_space<vmem>>, %arg4: memref<4x6x6xf32, #tpu.memory_space<vmem>>, %arg5: memref<4x5x5xf32, #tpu.memory_space<vmem>>) attributes {dimension_semantics = [#tpu.dimension_semantics<parallel>, #tpu.dimension_semantics<parallel>], iteration_bounds = array<i64: 2, 1>, scalar_prefetch = 0 : i64, scratch_operands = 0 : i64, tpu.core_type = #tpu.core_type<tc>, window_params = [{pipeline_mode = #tpu.pipeline_mode<synchronous>, transform_indices = @transform_0, window_bounds = array<i64: 3, 16, 6>}, {transform_indices = @transform_1, window_bounds = array<i64: 4, 16, 16>}, {transform_indices = @transform_2, window_bounds = array<i64: 4, 6, 6>}, {transform_indices = @transform_3, window_bounds = array<i64: 4, 5, 5>}]} {
    %c16_i32 = arith.constant 16 : i32
    %0 = arith.muli %arg1, %c16_i32 : i32
    %c0 = arith.constant 0 : index
    %c0_0 = arith.constant 0 : index
    %c0_1 = arith.constant 0 : index
    %1 = tpu.strided_load %arg3[%c0, %c0_0, %c0_1] {strides = array<i32: 1, 3, 1>} : memref<4x16x16xf32, #tpu.memory_space<vmem>>, vector<4x6x16xf32>
    %2 = tpu.iota {dimensions = array<i32: 0>} : vector<6x16xi32>
    %c3_i32 = arith.constant 3 : i32
    %3 = vector.broadcast %c3_i32 : i32 to vector<6x16xi32>
    %4 = arith.muli %2, %3 : vector<6x16xi32>
    %5 = vector.broadcast %0 : i32 to vector<6x16xi32>
    %6 = arith.addi %5, %4 : vector<6x16xi32>
    %c0_i32 = arith.constant 0 : i32
    %7 = vector.broadcast %c0_i32 : i32 to vector<6x16xi32>
    %8 = arith.addi %6, %7 : vector<6x16xi32>
    %c16_i32_2 = arith.constant 16 : i32
    %9 = vector.broadcast %c16_i32_2 : i32 to vector<6x16xi32>
    %10 = arith.cmpi slt, %8, %9 : vector<6x16xi32>
    %cst = arith.constant -3.40282347E+38 : f32
    %11 = vector.shape_cast %10 : vector<6x16xi1> to vector<1x6x16xi1>
    %12 = vector.broadcast %11 : vector<1x6x16xi1> to vector<4x6x16xi1>
    %13 = vector.broadcast %cst : f32 to vector<4x6x16xf32>
    %14 = arith.select %12, %1, %13 : vector<4x6x16xi1>, vector<4x6x16xf32>
    %c0_3 = arith.constant 0 : index
    %c1 = arith.constant 1 : index
    %c0_4 = arith.constant 0 : index
    %15 = tpu.strided_load %arg3[%c0_3, %c1, %c0_4] {strides = array<i32: 1, 3, 1>} : memref<4x16x16xf32, #tpu.memory_space<vmem>>, vector<4x5x16xf32>
    %cst_5 = arith.constant -3.40282347E+38 : f32
    %16 = vector.broadcast %cst_5 : f32 to vector<4x1x16xf32>
    %17 = tpu.concatenate %15, %16 in 1 : vector<4x5x16xf32>, vector<4x1x16xf32> -> vector<4x6x16xf32>
    %18 = tpu.iota {dimensions = array<i32: 0>} : vector<6x16xi32>
    %c3_i32_6 = arith.constant 3 : i32
    %19 = vector.broadcast %c3_i32_6 : i32 to vector<6x16xi32>
    %20 = arith.muli %18, %19 : vector<6x16xi32>
    %21 = vector.broadcast %0 : i32 to vector<6x16xi32>
    %22 = arith.addi %21, %20 : vector<6x16xi32>
    %c1_i32 = arith.constant 1 : i32
    %23 = vector.broadcast %c1_i32 : i32 to vector<6x16xi32>
    %24 = arith.addi %22, %23 : vector<6x16xi32>
    %c16_i32_7 = arith.constant 16 : i32
    %25 = vector.broadcast %c16_i32_7 : i32 to vector<6x16xi32>
    %26 = arith.cmpi slt, %24, %25 : vector<6x16xi32>
    %cst_8 = arith.constant -3.40282347E+38 : f32
    %27 = vector.shape_cast %26 : vector<6x16xi1> to vector<1x6x16xi1>
    %28 = vector.broadcast %27 : vector<1x6x16xi1> to vector<4x6x16xi1>
    %29 = vector.broadcast %cst_8 : f32 to vector<4x6x16xf32>
    %30 = arith.select %28, %17, %29 : vector<4x6x16xi1>, vector<4x6x16xf32>
    %c0_9 = arith.constant 0 : index
    %c2 = arith.constant 2 : index
    %c0_10 = arith.constant 0 : index
    %31 = tpu.strided_load %arg3[%c0_9, %c2, %c0_10] {strides = array<i32: 1, 3, 1>} : memref<4x16x16xf32, #tpu.memory_space<vmem>>, vector<4x5x16xf32>
    %cst_11 = arith.constant -3.40282347E+38 : f32
    %32 = vector.broadcast %cst_11 : f32 to vector<4x1x16xf32>
    %33 = tpu.concatenate %31, %32 in 1 : vector<4x5x16xf32>, vector<4x1x16xf32> -> vector<4x6x16xf32>
    %34 = tpu.iota {dimensions = array<i32: 0>} : vector<6x16xi32>
    %c3_i32_12 = arith.constant 3 : i32
    %35 = vector.broadcast %c3_i32_12 : i32 to vector<6x16xi32>
    %36 = arith.muli %34, %35 : vector<6x16xi32>
    %37 = vector.broadcast %0 : i32 to vector<6x16xi32>
    %38 = arith.addi %37, %36 : vector<6x16xi32>
    %c2_i32 = arith.constant 2 : i32
    %39 = vector.broadcast %c2_i32 : i32 to vector<6x16xi32>
    %40 = arith.addi %38, %39 : vector<6x16xi32>
    %c16_i32_13 = arith.constant 16 : i32
    %41 = vector.broadcast %c16_i32_13 : i32 to vector<6x16xi32>
    %42 = arith.cmpi slt, %40, %41 : vector<6x16xi32>
    %cst_14 = arith.constant -3.40282347E+38 : f32
    %43 = vector.shape_cast %42 : vector<6x16xi1> to vector<1x6x16xi1>
    %44 = vector.broadcast %43 : vector<1x6x16xi1> to vector<4x6x16xi1>
    %45 = vector.broadcast %cst_14 : f32 to vector<4x6x16xf32>
    %46 = arith.select %44, %33, %45 : vector<4x6x16xi1>, vector<4x6x16xf32>
    %47 = arith.maximumf %14, %30 : vector<4x6x16xf32>
    %48 = arith.maximumf %47, %46 : vector<4x6x16xf32>
    %cst_15 = arith.constant -3.40282347E+38 : f32
    %49 = vector.broadcast %cst_15 : f32 to vector<4x2x16xf32>
    %50 = tpu.concatenate %48, %49 in 1 : vector<4x6x16xf32>, vector<4x2x16xf32> -> vector<4x8x16xf32>
    %51 = vector.shape_cast %50 : vector<4x8x16xf32> to vector<32x16xf32>
    %c0_16 = arith.constant 0 : index
    %c0_17 = arith.constant 0 : index
    %c0_18 = arith.constant 0 : index
    %52 = vector.load %arg2[%c0_16, %c0_17, %c0_18] : memref<3x16x6xf32, #tpu.memory_space<vmem>>, vector<1x16x6xf32>
    %53 = vector.shape_cast %52 : vector<1x16x6xf32> to vector<16x6xf32>
    %cst_19 = arith.constant dense<0.000000e+00> : vector<32x6xf32>
    %54 = tpu.matmul %51, %53, %cst_19 {dimension_numbers = #tpu.dot_dimension_numbers<[1], [0], [0], [1], [0, 0, 1, 1], [], []>, precision = #tpu.contract_precision<fp32>} : vector<32x16xf32>, vector<16x6xf32>, vector<32x6xf32> -> vector<32x6xf32>
    %c1_20 = arith.constant 1 : index
    %c0_21 = arith.constant 0 : index
    %c0_22 = arith.constant 0 : index
    %55 = vector.load %arg2[%c1_20, %c0_21, %c0_22] : memref<3x16x6xf32, #tpu.memory_space<vmem>>, vector<1x16x6xf32>
    %56 = vector.shape_cast %55 : vector<1x16x6xf32> to vector<16x6xf32>
    %cst_23 = arith.constant dense<0.000000e+00> : vector<32x6xf32>
    %57 = tpu.matmul %51, %56, %cst_23 {dimension_numbers = #tpu.dot_dimension_numbers<[1], [0], [0], [1], [0, 0, 1, 1], [], []>, precision = #tpu.contract_precision<fp32>} : vector<32x16xf32>, vector<16x6xf32>, vector<32x6xf32> -> vector<32x6xf32>
    %58 = arith.maximumf %54, %57 : vector<32x6xf32>
    %c2_24 = arith.constant 2 : index
    %c0_25 = arith.constant 0 : index
    %c0_26 = arith.constant 0 : index
    %59 = vector.load %arg2[%c2_24, %c0_25, %c0_26] : memref<3x16x6xf32, #tpu.memory_space<vmem>>, vector<1x16x6xf32>
    %60 = vector.shape_cast %59 : vector<1x16x6xf32> to vector<16x6xf32>
    %cst_27 = arith.constant dense<0.000000e+00> : vector<32x6xf32>
    %61 = tpu.matmul %51, %60, %cst_27 {dimension_numbers = #tpu.dot_dimension_numbers<[1], [0], [0], [1], [0, 0, 1, 1], [], []>, precision = #tpu.contract_precision<fp32>} : vector<32x16xf32>, vector<16x6xf32>, vector<32x6xf32> -> vector<32x6xf32>
    %62 = arith.maximumf %58, %61 : vector<32x6xf32>
    %63 = vector.shape_cast %62 : vector<32x6xf32> to vector<4x8x6xf32>
    %64 = vector.extract_strided_slice %63 {offsets = [0, 0, 0], sizes = [4, 6, 6], strides = [1, 1, 1]} : vector<4x8x6xf32> to vector<4x6x6xf32>
    %c0_28 = arith.constant 0 : index
    %c0_29 = arith.constant 0 : index
    %c0_30 = arith.constant 0 : index
    %65 = vector.load %arg4[%c0_28, %c0_29, %c0_30] : memref<4x6x6xf32, #tpu.memory_space<vmem>>, vector<4x6x6xf32>
    tpu.vector_store %arg4[%c0_28, %c0_29, %c0_30], %64 {strides = array<i32>} : memref<4x6x6xf32, #tpu.memory_space<vmem>>, vector<4x6x6xf32>,
    %66 = vector.extract_strided_slice %63 {offsets = [0, 0, 0], sizes = [4, 5, 5], strides = [1, 1, 1]} : vector<4x8x6xf32> to vector<4x5x5xf32>
    %c0_31 = arith.constant 0 : index
    %c0_32 = arith.constant 0 : index
    %c0_33 = arith.constant 0 : index
    %67 = vector.load %arg5[%c0_31, %c0_32, %c0_33] : memref<4x5x5xf32, #tpu.memory_space<vmem>>, vector<4x5x5xf32>
    tpu.vector_store %arg5[%c0_31, %c0_32, %c0_33], %66 {strides = array<i32>} : memref<4x5x5xf32, #tpu.memory_space<vmem>>, vector<4x5x5xf32>,
    return
  }
  func.func @transform_0(%arg0: i32, %arg1: i32) -> (i32, i32, i32) {
    %c0_i32 = arith.constant 0 : i32
    %c0_i32_0 = arith.constant 0 : i32
    %c0_i32_1 = arith.constant 0 : i32
    %c0_i32_2 = arith.constant 0 : i32
    return %c0_i32, %c0_i32_0, %c0_i32_1 : i32, i32, i32
  }
  func.func @transform_1(%arg0: i32, %arg1: i32) -> (i32, i32, i32) {
    %c0_i32 = arith.constant 0 : i32
    %c0_i32_0 = arith.constant 0 : i32
    return %arg0, %arg1, %c0_i32 : i32, i32, i32
  }
  func.func @transform_2(%arg0: i32, %arg1: i32) -> (i32, i32, i32) {
    %c0_i32 = arith.constant 0 : i32
    %c0_i32_0 = arith.constant 0 : i32
    return %arg0, %arg1, %c0_i32 : i32, i32, i32
  }
  func.func @transform_3(%arg0: i32, %arg1: i32) -> (i32, i32, i32) {
    %c0_i32 = arith.constant 0 : i32
    %c0_i32_0 = arith.constant 0 : i32
    return %arg0, %arg1, %c0_i32 : i32, i32, i32
  }
}

</mosaic_0001>

<llo_original>
// kernel: maxpool2d_both.1
$region0: #{maxpool2d_both.1}
  #allocation0 [shape = 'u32[]', space=smem, size = 0x4, offset = 0x4, fixed_abs, tag = 'smem constant byte address 0x4 - core index']
  #allocation1 [shape = 'u32[144,128]{1,0:T(1,128)}', space=vmem, size = 0x12000, scoped, tag = 'internal scratch']
  %s0 = inlined_call_operand.hbm [shape: f32[3,16,6], index: 0, kind: input, shape index: {}]
  %s1 = inlined_call_operand.hbm [shape: f32[8,16,16], index: 1, kind: input, shape index: {}]
  %s2 = inlined_call_operand.vmem [shape: f32[8,6,6], index: 2, kind: output, shape index: {0}]
  %s3 = inlined_call_operand.vmem [shape: f32[8,5,5], index: 3, kind: output, shape index: {1}]
  %4 = xla_tuple %s2, %s3
  %s5 = sld [smem:[#allocation0]]
  $region57: #{maxpool2d_both.1} parent=0
    _
  %s7 = ssub.s32 1, %s5
  %s8 = scalar_select 0, %s7, %s5
  $region1: #{maxpool2d_both.1} parent=0
    #allocation2 [shape = 'u8[24576]{0}', space=vmem, size = 0x6000, scoped, tag = 'input window, operand 0, single buffered']
    #allocation3 [shape = 's32[2]{0}', space=sflag, size = 0x8, scoped, tag = 'scoped memory for maxpool2d_both.1']
    #allocation4 [shape = 'u8[65536]{0}', space=vmem, size = 0x10000, scoped, tag = 'input window, operand 1']
    #allocation5 [shape = 's32[2]{0}', space=sflag, size = 0x8, scoped, tag = 'scoped memory for maxpool2d_both.1']
    %9 = vsyncpa [#allocation3], 0
    %10 = vsyncpa [#allocation5], 0
    %s11 = scalar_lea.sflag [#allocation5], 1
    %12 = vsyncpa %s11, 0
    loop: start=0, step=1, limit=4
    $region2: #{maxpool2d_both.1} parent=1 // loop_pre_header
      _
    $region3: #{maxpool2d_both.1} parent=1 // loop_header
      %s14 = sphi 0, %s18
      %p15 = scmp.ge.s32.totalorder %s14, 4
      %s21 = sphi 0, %s33
      %s22 = sphi 0, %s29
      %s23 = sphi 0, %s21
      %s24 = sphi 0, %s22
      %s25 = sphi 0, %s23
      %s26 = sphi 0, %s24
      %s34 = sphi 0, %s34
      %s36 = sphi 0, %s34
      %s37 = sphi 0, %s36
      %s51 = sphi 0, %s37
      %s59 = sphi 0, %s61
      %s62 = sphi 0, %s59
      %s63 = sphi 0, %s62
      %s79 = sphi 0, %s63
      %s87 = sphi 0, %s89
      %s90 = sphi 0, %s87
      %s91 = sphi 0, %s90
      %s107 = sphi 0, %s91
      %s115 = sphi 0, %s117
      %s118 = sphi 0, %s115
      %s119 = sphi 0, %s118
      %s135 = sphi 0, %s119
    $region4: #{maxpool2d_both.1} parent=1 // loop_header_branch
      %17 = sbr.rel (%p15) target = $region8
    $region5: #{maxpool2d_both.1} parent=1 // loop_body
      %s19 = ssub.s32 %s14, 1
      %s20 = ssub.s32 %s14, 2
      %s27 = sadd.s32 1, %s22
      %p28 = scmp.ge.s32.totalorder %s27, 1
      %s29 = scalar_select %p28, 0, %s27
      %s30 = sadd.s32 1, %s21
      %s31 = scalar_select %p28, %s30, %s21
      %p32 = scmp.ge.s32.totalorder %s31, 2
      %s33 = scalar_select %p32, 0, %s31
      %s35 = sadd.s32 %s34, 1
      %p38 = scmp.eq.s32.totalorder %s14, 1
      %p39 = scmp.ne.s32.totalorder %s34, %s36
      %p40 = scmp.eq.s32.totalorder %s14, 0
      %p41 = por %p39, %p40
      %p42 = scmp.ne.s32.totalorder %s34, %s36
      %p43 = scmp.eq.s32.totalorder %s19, 1
      %p44 = por %p42, %p43
      %p45 = scmp.ne.s32.totalorder %s36, %s37
      %p46 = scmp.eq.s32.totalorder %s19, 0
      %p47 = por %p45, %p46
      %p48 = scmp.ne.s32.totalorder %s36, %s37
      %p49 = scmp.eq.s32.totalorder %s20, 1
      %p50 = por %p48, %p49
      %p52 = scmp.ne.s32.totalorder %s37, %s51
      %p53 = scmp.eq.s32.totalorder %s20, 0
      %p54 = por %p52, %p53
      %s55 = ssub.s32 %s21, %s33
      %s56 = ssub.s32 %s22, %s29
      %s57 = sor.u32 %s55, %s56
      %p58 = scmp.eq.s32.totalorder %s57, 0
      %s60 = sadd.s32 %s59, 1
      %s61 = scalar_select %p58, %s59, %s60
      %p64 = pneg %p58
      %p65 = scmp.eq.s32.totalorder %s14, 1
      %p66 = por %p64, %p65
      %p67 = scmp.ne.s32.totalorder %s59, %s62
      %p68 = scmp.eq.s32.totalorder %s14, 0
      %p69 = por %p67, %p68
      %p70 = scmp.ne.s32.totalorder %s59, %s62
      %p71 = scmp.eq.s32.totalorder %s19, 1
      %p72 = por %p70, %p71
      %p73 = scmp.ne.s32.totalorder %s62, %s63
      %p74 = scmp.eq.s32.totalorder %s19, 0
      %p75 = por %p73, %p74
      %p76 = scmp.ne.s32.totalorder %s62, %s63
      %p77 = scmp.eq.s32.totalorder %s20, 1
      %p78 = por %p76, %p77
      %p80 = scmp.ne.s32.totalorder %s63, %s79
      %p81 = scmp.eq.s32.totalorder %s20, 0
      %p82 = por %p80, %p81
      %s83 = ssub.s32 %s21, %s33
      %s84 = ssub.s32 %s22, %s29
      %s85 = sor.u32 %s83, %s84
      %p86 = scmp.eq.s32.totalorder %s85, 0
      %s88 = sadd.s32 %s87, 1
      %s89 = scalar_select %p86, %s87, %s88
      %p92 = pneg %p86
      %p93 = scmp.eq.s32.totalorder %s14, 1
      %p94 = por %p92, %p93
      %p95 = scmp.ne.s32.totalorder %s87, %s90
      %p96 = scmp.eq.s32.totalorder %s14, 0
      %p97 = por %p95, %p96
      %p98 = scmp.ne.s32.totalorder %s87, %s90
      %p99 = scmp.eq.s32.totalorder %s19, 1
      %p100 = por %p98, %p99
      %p101 = scmp.ne.s32.totalorder %s90, %s91
      %p102 = scmp.eq.s32.totalorder %s19, 0
      %p103 = por %p101, %p102
      %p104 = scmp.ne.s32.totalorder %s90, %s91
      %p105 = scmp.eq.s32.totalorder %s20, 1
      %p106 = por %p104, %p105
      %p108 = scmp.ne.s32.totalorder %s91, %s107
      %p109 = scmp.eq.s32.totalorder %s20, 0
      %p110 = por %p108, %p109
      %s111 = ssub.s32 %s21, %s33
      %s112 = ssub.s32 %s22, %s29
      %s113 = sor.u32 %s111, %s112
      %p114 = scmp.eq.s32.totalorder %s113, 0
      %s116 = sadd.s32 %s115, 1
      %s117 = scalar_select %p114, %s115, %s116
      %p120 = pneg %p114
      %p121 = scmp.eq.s32.totalorder %s14, 1
      %p122 = por %p120, %p121
      %p123 = scmp.ne.s32.totalorder %s115, %s118
      %p124 = scmp.eq.s32.totalorder %s14, 0
      %p125 = por %p123, %p124
      %p126 = scmp.ne.s32.totalorder %s115, %s118
      %p127 = scmp.eq.s32.totalorder %s19, 1
      %p128 = por %p126, %p127
      %p129 = scmp.ne.s32.totalorder %s118, %s119
      %p130 = scmp.eq.s32.totalorder %s19, 0
      %p131 = por %p129, %p130
      %p132 = scmp.ne.s32.totalorder %s118, %s119
      %p133 = scmp.eq.s32.totalorder %s20, 1
      %p134 = por %p132, %p133
      %p136 = scmp.ne.s32.totalorder %s119, %s135
      %p137 = scmp.eq.s32.totalorder %s20, 0
      %p138 = por %p136, %p137
      %p139 = scmp.le.s32.totalorder 1, %s14
      %p140 = scmp.lt.s32.totalorder %s14, 3
      %p141 = pnand %p139, %p140
      %p142 = pneg %p141
      // Predicated region
      $region9: #{maxpool2d_both.1} parent=5 // pred_check
        _
      $region10: #{maxpool2d_both.1} parent=5 // pred_check_branch
        %144 = sbr.rel (%p141) target = $region12
      $region11: #{maxpool2d_both.1} parent=5 // pred_region
        %s145 = ssub.s32 %s14, 1
        // Predicated region
        $region13: #{maxpool2d_both.1} parent=11 // pred_check
          %p146 = pneg %p47
        $region14: #{maxpool2d_both.1} parent=11 // pred_check_branch
          %148 = sbr.rel (%p146) target = $region16
        $region15: #{maxpool2d_both.1} parent=11 // pred_region
          %s150 = ssub.s32 768, 768
          %151 = vsyncadd [#allocation3], %s150
          %s152 = sshll.u32 [#allocation2], 4
          %s153 = int_to_ptr.vmem [resolvable:$true] %s152
          %158 = dma.hbm_to_vmem [thread:$0]  %s0, 768, %s153, [#allocation3], 128, 128, 8
        $region16: #{maxpool2d_both.1} parent=11 // pred_fallthru
          _
      $region12: #{maxpool2d_both.1} parent=5 // pred_fallthru
        _
      %p159 = scmp.lt.s32.totalorder %s14, 2
      // Predicated region
      $region17: #{maxpool2d_both.1} parent=5 // pred_check
        %p160 = pneg %p159
      $region18: #{maxpool2d_both.1} parent=5 // pred_check_branch
        %162 = sbr.rel (%p160) target = $region20
      $region19: #{maxpool2d_both.1} parent=5 // pred_region
        // Predicated region
        $region21: #{maxpool2d_both.1} parent=19 // pred_check
          %p163 = pneg %p69
        $region22: #{maxpool2d_both.1} parent=19 // pred_check_branch
          %165 = sbr.rel (%p163) target = $region24
        $region23: #{maxpool2d_both.1} parent=19 // pred_region
          %s166 = sand.u32 %s59, 1
          %s167 = scalar_lea.sflag [#allocation5], %s166
          %s168 = sand.u32 %s59, 1
          %s169 = smul.addr %s168, 64
          %s170 = scalar_lea.vmem [#allocation4], %s169
          %s171 = smul.u32 4, %s21
          %s172 = smul.u32 2, %s22
          %s174 = ssub.s32 1024, 1024
          %175 = vsyncadd %s167, %s174
          %s176 = smul.addr %s171, 2
          %s177 = sadd.s32 %s172, %s176
          %s178 = smul.addr %s177, 128
          %s179 = scalar_lea.hbm %s1, %s178
          %s180 = sshll.u32 %s170, 4
          %s181 = int_to_ptr.vmem [resolvable:$true] %s180
          %186 = dma.hbm_to_vmem [thread:$0]  %s179, 1024, %s181, %s167, 128, 128, 8
        $region24: #{maxpool2d_both.1} parent=19 // pred_fallthru
          _
      $region20: #{maxpool2d_both.1} parent=5 // pred_fallthru
        _
      %p187 = scmp.le.s32.totalorder 1, %s14
      %p188 = scmp.lt.s32.totalorder %s14, 3
      %p189 = pnand %p187, %p188
      %p190 = pneg %p189
      // Predicated region
      $region25: #{maxpool2d_both.1} parent=5 // pred_check
        _
      $region26: #{maxpool2d_both.1} parent=5 // pred_check_branch
        %192 = sbr.rel (%p189) target = $region28
      $region27: #{maxpool2d_both.1} parent=5 // pred_region
        %s193 = ssub.s32 %s14, 1
        // Predicated region
        $region29: #{maxpool2d_both.1} parent=27 // pred_check
          %p194 = pneg %p47
        $region30: #{maxpool2d_both.1} parent=27 // pred_check_branch
          %196 = sbr.rel (%p194) target = $region32
        $region31: #{maxpool2d_both.1} parent=27 // pred_region
          %197 = dma.done [#allocation3], 768
        $region32: #{maxpool2d_both.1} parent=27 // pred_fallthru
          _
        %s198 = sand.u32 %s62, 1
        %s199 = scalar_lea.sflag [#allocation5], %s198
        %s200 = sand.u32 %s62, 1
        %s201 = smul.addr %s200, 64
        %s202 = scalar_lea.vmem [#allocation4], %s201
        // Predicated region
        $region33: #{maxpool2d_both.1} parent=27 // pred_check
          %p203 = pneg %p75
        $region34: #{maxpool2d_both.1} parent=27 // pred_check_branch
          %205 = sbr.rel (%p203) target = $region36
        $region35: #{maxpool2d_both.1} parent=27 // pred_region
          %206 = dma.done %s199, 1024
        $region36: #{maxpool2d_both.1} parent=27 // pred_fallthru
          _
        %p207 = pneg %p47
        %p208 = pneg %p44
        %s209 = sand.u32 %s62, 1
        %s210 = scalar_lea.sflag [#allocation5], %s209
        %s211 = sand.u32 %s62, 1
        %s212 = smul.addr %s211, 64
        %s213 = scalar_lea.vmem [#allocation4], %s212
        %p214 = pneg %p75
        %p215 = pneg %p72
        %p216 = pneg %p103
        %p217 = pneg %p100
        %s218 = smul.u32 4, %s23
        %p219 = scmp.lt.s32.totalorder %s218, 7
        %s220 = scalar_select %p219, %s218, 7
        %p221 = scmp.lt.s32.totalorder %s24, 0
        %s222 = scalar_select %p221, %s24, 0
        %s223 = sadd.s32 %s222, %s220
        %s224 = smul.addr %s223, 8
        %s225 = scalar_lea.vmem %s2, %s224
        %p226 = pneg %p131
        %p227 = pneg %p128
        %s228 = smul.u32 4, %s23
        %p229 = scmp.lt.s32.totalorder %s228, 7
        %s230 = scalar_select %p229, %s228, 7
        %p231 = scmp.lt.s32.totalorder %s24, 0
        %s232 = scalar_select %p231, %s24, 0
        %s233 = sadd.s32 %s232, %s230
        %s234 = smul.addr %s233, 8
        %s235 = scalar_lea.vmem %s3, %s234
        %s236 = smul.u32 4, %s23
        %s237 = smul.u32 2, %s24
        %s238 = smul.u32 4, %s23
        %p239 = scmp.lt.s32.totalorder %s238, 7
        %s240 = scalar_select %p239, %s238, 7
        %p241 = scmp.lt.s32.totalorder %s24, 0
        %s242 = scalar_select %p241, %s24, 0
        %s243 = sadd.s32 %s242, %s240
        %s244 = smul.addr %s243, 8
        %s245 = scalar_lea.vmem %s2, %s244
        %s246 = smul.u32 4, %s23
        %s247 = smul.u32 4, %s23
        %p248 = scmp.lt.s32.totalorder %s247, 7
        %s249 = scalar_select %p248, %s247, 7
        %p250 = scmp.lt.s32.totalorder %s24, 0
        %s251 = scalar_select %p250, %s24, 0
        %s252 = sadd.s32 %s251, %s249
        %s253 = smul.addr %s252, 8
        %s254 = scalar_lea.vmem %s3, %s253
        %s255 = smul.u32 4, %s23
        %s256 = smul.u32 %s24, 16
        %v257 = vld [vmem:[%s202] ss:$3 sm:$0x3f]
        %s258 = scalar_lea.vmem %s202, 16 [#allocation4]
        %v259 = vld [vmem:[%s258] ss:$3 sm:$0x3f]
        %s260 = scalar_lea.vmem %s202, 32 [#allocation4]
        %v261 = vld [vmem:[%s260] ss:$3 sm:$0x3f]
        %s262 = scalar_lea.vmem %s202, 48 [#allocation4]
        %v263 = vld [vmem:[%s262] ss:$3 sm:$0x3f]
        %v264 = vlaneseq
        %v265 = vshrl.u32 %v264, 7
        %v266 = vmul.u32 %v265, 3
        %v267 = vstv %s256
        %v268 = vadd.s32 %v267, %v266
        %vm269 = vcmp.lt.s32.totalorder %v268, 16
        %v270 = vsel %vm269, 1, 0
        %vm271 = vcmp.eq.s32.totalorder %v270, 1
        %v272 = vsel %vm271, %v257, -3.4028235e+38
        %v273 = vsel %vm271, %v259, -3.4028235e+38
        %v274 = vsel %vm271, %v261, -3.4028235e+38
        %v275 = vsel %vm271, %v263, -3.4028235e+38
        %s276 = scalar_lea.vmem %s202, 1 [#allocation4]
        %v277 = vld [vmem:[%s276] ss:$3 sm:$0x1f]
        %s278 = scalar_lea.vmem %s202, 17 [#allocation4]
        %v279 = vld [vmem:[%s278] ss:$3 sm:$0x1f]
        %s280 = scalar_lea.vmem %s202, 33 [#allocation4]
        %v281 = vld [vmem:[%s280] ss:$3 sm:$0x1f]
        %s282 = scalar_lea.vmem %s202, 49 [#allocation4]
        %v283 = vld [vmem:[%s282] ss:$3 sm:$0x1f]
        %vm284 = vcmask 1044480
        %v285 = vsel %vm284, %v277, -3.4028235e+38
        %v286 = vsel %vm284, %v279, -3.4028235e+38
        %v287 = vsel %vm284, %v281, -3.4028235e+38
        %v288 = vsel %vm284, %v283, -3.4028235e+38
        %v289 = vadd.s32 %v268, 1
        %vm290 = vcmp.lt.s32.totalorder %v289, 16
        %v291 = vsel %vm290, 1, 0
        %vm292 = vcmp.eq.s32.totalorder %v291, 1
        %v293 = vsel %vm292, %v285, -3.4028235e+38
        %v294 = vsel %vm292, %v286, -3.4028235e+38
        %v295 = vsel %vm292, %v287, -3.4028235e+38
        %v296 = vsel %vm292, %v288, -3.4028235e+38
        %s297 = scalar_lea.vmem %s202, 2 [#allocation4]
        %v298 = vld [vmem:[%s297] ss:$3 sm:$0x1f]
        %s299 = scalar_lea.vmem %s202, 18 [#allocation4]
        %v300 = vld [vmem:[%s299] ss:$3 sm:$0x1f]
        %s301 = scalar_lea.vmem %s202, 34 [#allocation4]
        %v302 = vld [vmem:[%s301] ss:$3 sm:$0x1f]
        %s303 = scalar_lea.vmem %s202, 50 [#allocation4]
        %v304 = vld [vmem:[%s303] ss:$3 sm:$0x1f]
        %v305 = vsel %vm284, %v298, -3.4028235e+38
        %v306 = vsel %vm284, %v300, -3.4028235e+38
        %v307 = vsel %vm284, %v302, -3.4028235e+38
        %v308 = vsel %vm284, %v304, -3.4028235e+38
        %v309 = vadd.s32 %v268, 2
        %vm310 = vcmp.lt.s32.totalorder %v309, 16
        %v311 = vsel %vm310, 1, 0
        %vm312 = vcmp.eq.s32.totalorder %v311, 1
        %v313 = vsel %vm312, %v305, -3.4028235e+38
        %v314 = vsel %vm312, %v306, -3.4028235e+38
        %v315 = vsel %vm312, %v307, -3.4028235e+38
        %v316 = vsel %vm312, %v308, -3.4028235e+38
        %v317 = vmax.f32 %v272, %v293
        %v318 = vmax.f32 %v273, %v294
        %v319 = vmax.f32 %v274, %v295
        %v320 = vmax.f32 %v275, %v296
        %v321 = vmax.f32 %v317, %v313
        %v322 = vmax.f32 %v318, %v314
        %v323 = vmax.f32 %v319, %v315
        %v324 = vmax.f32 %v320, %v316
        %vm325 = vcmask 1045504
        %v326 = vsel %vm325, %v321, -3.4028235e+38
        %v327 = vsel %vm325, %v322, -3.4028235e+38
        %v328 = vsel %vm325, %v323, -3.4028235e+38
        %v329 = vsel %vm325, %v324, -3.4028235e+38
        %v330 = vld [vmem:[#allocation2] sm:$0xff]
        %v331 = vld [vmem:[#allocation2 + $0x8] sm:$0xff]
        %vm332 = vcmask 130048
        %v334 = vsel %vm332, %v326, 0
        %v337 = vsel %vm332, %v327, 0
        %v340 = vsel %vm332, %v328, 0
        %v343 = vsel %vm332, %v329, 0
        %345 = vmatprep.subr.mxu0 0.0
        %v346 = vand.u32 %v330, 4294901760
        %347 = vmatpush1.msra.mxu0 %v346
        %348 = vmatprep.subr.mxu0 0.0
        %v349 = vand.u32 %v331, 4294901760
        %350 = vmatpush1.msra.mxu0 %v349
        %351 = vmatprep.subr.mxu0 0.0
        %352 = vmatpush1.msra.mxu0 0.0
        %353 = vmatprep.subr.mxu0 0.0
        %354 = vmatpush1.msra.mxu0 0.0
        %355 = vmatprep.subr.mxu0 0.0
        %356 = vmatpush1.msra.mxu0 0.0
        %357 = vmatprep.subr.mxu0 0.0
        %358 = vmatpush1.msra.mxu0 0.0
        %359 = vmatprep.subr.mxu0 0.0
        %360 = vmatpush1.msra.mxu0 0.0
        %361 = vmatprep.subr.mxu0 0.0
        %362 = vmatpush1.msra.mxu0 0.0
        %363 = vmatprep.subr.mxu0 0.0
        %364 = vmatpush1.msra.mxu0 0.0
        %365 = vmatprep.subr.mxu0 0.0
        %366 = vmatpush1.msra.mxu0 0.0
        %367 = vmatprep.subr.mxu0 0.0
        %368 = vmatpush1.msra.mxu0 0.0
        %369 = vmatprep.subr.mxu0 0.0
        %370 = vmatpush1.msra.mxu0 0.0
        %371 = vmatprep.subr.mxu0 0.0
        %372 = vmatpush1.msra.mxu0 0.0
        %373 = vmatprep.subr.mxu0 0.0
        %374 = vmatpush1.msra.mxu0 0.0
        %375 = vmatprep.subr.mxu0 0.0
        %376 = vmatpush1.msra.mxu0 0.0
        %377 = vmatprep.subr.mxu0 0.0
        %378 = vmatpush1.msra.mxu0 0.0
        %379 = vmatprep.subr.mxu0 0.0
        %380 = vmatpush1.msra.mxu0 0.0
        %381 = vmatprep.subr.mxu0 0.0
        %382 = vmatpush1.msra.mxu0 0.0
        %383 = vmatprep.subr.mxu0 0.0
        %384 = vmatpush1.msra.mxu0 0.0
        %385 = vmatprep.subr.mxu0 0.0
        %386 = vmatpush1.msra.mxu0 0.0
        %387 = vmatprep.subr.mxu0 0.0
        %388 = vmatpush1.msra.mxu0 0.0
        %389 = vmatprep.subr.mxu0 0.0
        %390 = vmatpush1.msra.mxu0 0.0
        %391 = vmatprep.subr.mxu0 0.0
        %392 = vmatpush1.msra.mxu0 0.0
        %393 = vmatprep.subr.mxu0 0.0
        %394 = vmatpush1.msra.mxu0 0.0
        %395 = vmatprep.subr.mxu0 0.0
        %396 = vmatpush1.msra.mxu0 0.0
        %397 = vmatprep.subr.mxu0 0.0
        %398 = vmatpush1.msra.mxu0 0.0
        %399 = vmatprep.subr.mxu0 0.0
        %400 = vmatpush1.msra.mxu0 0.0
        %401 = vmatprep.subr.mxu0 0.0
        %402 = vmatpush1.msra.mxu0 0.0
        %403 = vmatprep.subr.mxu0 0.0
        %404 = vmatpush1.msra.mxu0 0.0
        %405 = vmatprep.subr.mxu0 0.0
        %406 = vmatpush1.msra.mxu0 0.0
        %407 = vmatprep.subr.mxu0 0.0
        %408 = vmatpush1.msra.mxu0 0.0
        %409 = vmatprep.subr.mxu0 0.0
        %410 = vmatpush1.msra.mxu0 0.0
        %411 = vmatprep.mubr.f32.mxu0 0.0
        %v412 = vand.u32 %v334, 4294901760
        %v413 = vsub.f32 %v334, %v412
        %v414 = vand.u32 %v413, 4294901760
        %v415 = vsub.f32 %v413, %v414
        %v416 = vand.u32 %v415, 4294901760
        %417 = vmatmul.mubr.f32.gmra.mrb[0].mxu0 %v416
        %v418 = vpop.f32.mrb[0].mxu0
        %v419 = vadd.f32 0.0, %v418
        %v420 = vpop.f32.mrb[0].mxu0
        %421 = vmatprep.mubr.f32.mxu0 0.0
        %v422 = vand.u32 %v337, 4294901760
        %v423 = vsub.f32 %v337, %v422
        %v424 = vand.u32 %v423, 4294901760
        %v425 = vsub.f32 %v423, %v424
        %v426 = vand.u32 %v425, 4294901760
        %427 = vmatmul.mubr.f32.gmra.mrb[0].mxu0 %v426
        %v428 = vpop.f32.mrb[0].mxu0
        %v429 = vadd.f32 0.0, %v428
        %v430 = vpop.f32.mrb[0].mxu0
        %431 = vmatprep.mubr.f32.mxu0 0.0
        %v432 = vand.u32 %v340, 4294901760
        %v433 = vsub.f32 %v340, %v432
        %v434 = vand.u32 %v433, 4294901760
        %v435 = vsub.f32 %v433, %v434
        %v436 = vand.u32 %v435, 4294901760
        %437 = vmatmul.mubr.f32.gmra.mrb[0].mxu0 %v436
        %v438 = vpop.f32.mrb[0].mxu0
        %v439 = vadd.f32 0.0, %v438
        %v440 = vpop.f32.mrb[0].mxu0
        %441 = vmatprep.mubr.f32.mxu0 0.0
        %v442 = vand.u32 %v343, 4294901760
        %v443 = vsub.f32 %v343, %v442
        %v444 = vand.u32 %v443, 4294901760
        %v445 = vsub.f32 %v443, %v444
        %v446 = vand.u32 %v445, 4294901760
        %447 = vmatmul.mubr.f32.gmra.mrb[0].mxu0 %v446
        %v448 = vpop.f32.mrb[0].mxu0
        %v449 = vadd.f32 0.0, %v448
        %v450 = vpop.f32.mrb[0].mxu0
        %451 = vdwg.mxu0
        %452 = vmatprep.subr.mxu0 0.0
        %v453 = vand.u32 %v330, 4294901760
        %v454 = vsub.f32 %v330, %v453
        %v455 = vand.u32 %v454, 4294901760
        %v456 = vsub.f32 %v454, %v455
        %v457 = vand.u32 %v456, 4294901760
        %458 = vmatpush1.msra.mxu0 %v457
        %459 = vmatprep.subr.mxu0 0.0
        %v460 = vand.u32 %v331, 4294901760
        %v461 = vsub.f32 %v331, %v460
        %v462 = vand.u32 %v461, 4294901760
        %v463 = vsub.f32 %v461, %v462
        %v464 = vand.u32 %v463, 4294901760
        %465 = vmatpush1.msra.mxu0 %v464
        %466 = vmatprep.subr.mxu0 0.0
        %467 = vmatpush1.msra.mxu0 0.0
        %468 = vmatprep.subr.mxu0 0.0
        %469 = vmatpush1.msra.mxu0 0.0
        %470 = vmatprep.subr.mxu0 0.0
        %471 = vmatpush1.msra.mxu0 0.0
        %472 = vmatprep.subr.mxu0 0.0
        %473 = vmatpush1.msra.mxu0 0.0
        %474 = vmatprep.subr.mxu0 0.0
        %475 = vmatpush1.msra.mxu0 0.0
        %476 = vmatprep.subr.mxu0 0.0
        %477 = vmatpush1.msra.mxu0 0.0
        %478 = vmatprep.subr.mxu0 0.0
        %479 = vmatpush1.msra.mxu0 0.0
        %480 = vmatprep.subr.mxu0 0.0
        %481 = vmatpush1.msra.mxu0 0.0
        %482 = vmatprep.subr.mxu0 0.0
        %483 = vmatpush1.msra.mxu0 0.0
        %484 = vmatprep.subr.mxu0 0.0
        %485 = vmatpush1.msra.mxu0 0.0
        %486 = vmatprep.subr.mxu0 0.0
        %487 = vmatpush1.msra.mxu0 0.0
        %488 = vmatprep.subr.mxu0 0.0
        %489 = vmatpush1.msra.mxu0 0.0
        %490 = vmatprep.subr.mxu0 0.0
        %491 = vmatpush1.msra.mxu0 0.0
        %492 = vmatprep.subr.mxu0 0.0
        %493 = vmatpush1.msra.mxu0 0.0
        %494 = vmatprep.subr.mxu0 0.0
        %495 = vmatpush1.msra.mxu0 0.0
        %496 = vmatprep.subr.mxu0 0.0
        %497 = vmatpush1.msra.mxu0 0.0
        %498 = vmatprep.subr.mxu0 0.0
        %499 = vmatpush1.msra.mxu0 0.0
        %500 = vmatprep.subr.mxu0 0.0
        %501 = vmatpush1.msra.mxu0 0.0
        %502 = vmatprep.subr.mxu0 0.0
        %503 = vmatpush1.msra.mxu0 0.0
        %504 = vmatprep.subr.mxu0 0.0
        %505 = vmatpush1.msra.mxu0 0.0
        %506 = vmatprep.subr.mxu0 0.0
        %507 = vmatpush1.msra.mxu0 0.0
        %508 = vmatprep.subr.mxu0 0.0
        %509 = vmatpush1.msra.mxu0 0.0
        %510 = vmatprep.subr.mxu0 0.0
        %511 = vmatpush1.msra.mxu0 0.0
        %512 = vmatprep.subr.mxu0 0.0
        %513 = vmatpush1.msra.mxu0 0.0
        %514 = vmatprep.subr.mxu0 0.0
        %515 = vmatpush1.msra.mxu0 0.0
        %516 = vmatprep.subr.mxu0 0.0
        %517 = vmatpush1.msra.mxu0 0.0
        %518 = vmatprep.subr.mxu0 0.0
        %519 = vmatpush1.msra.mxu0 0.0
        %520 = vmatprep.subr.mxu0 0.0
        %521 = vmatpush1.msra.mxu0 0.0
        %522 = vmatprep.subr.mxu0 0.0
        %523 = vmatpush1.msra.mxu0 0.0
        %524 = vmatprep.subr.mxu0 0.0
        %525 = vmatpush1.msra.mxu0 0.0
        %526 = vmatprep.mubr.f32.mxu0 0.0
        %v527 = vand.u32 %v334, 4294901760
        %528 = vmatmul.mubr.f32.gmra.mrb[0].mxu0 %v527
        %v529 = vpop.f32.mrb[0].mxu0
        %v530 = vadd.f32 %v419, %v529
        %v531 = vpop.f32.mrb[0].mxu0
        %532 = vmatprep.mubr.f32.mxu0 0.0
        %v533 = vand.u32 %v337, 4294901760
        %534 = vmatmul.mubr.f32.gmra.mrb[0].mxu0 %v533
        %v535 = vpop.f32.mrb[0].mxu0
        %v536 = vadd.f32 %v429, %v535
        %v537 = vpop.f32.mrb[0].mxu0
        %538 = vmatprep.mubr.f32.mxu0 0.0
        %v539 = vand.u32 %v340, 4294901760
        %540 = vmatmul.mubr.f32.gmra.mrb[0].mxu0 %v539
        %v541 = vpop.f32.mrb[0].mxu0
        %v542 = vadd.f32 %v439, %v541
        %v543 = vpop.f32.mrb[0].mxu0
        %544 = vmatprep.mubr.f32.mxu0 0.0
        %v545 = vand.u32 %v343, 4294901760
        %546 = vmatmul.mubr.f32.gmra.mrb[0].mxu0 %v545
        %v547 = vpop.f32.mrb[0].mxu0
        %v548 = vadd.f32 %v449, %v547
        %v549 = vpop.f32.mrb[0].mxu0
        %550 = vdwg.mxu0
        %551 = vmatprep.subr.mxu0 0.0
        %v552 = vand.u32 %v330, 4294901760
        %v553 = vsub.f32 %v330, %v552
        %554 = vmatpush1.msra.mxu0 %v553
        %555 = vmatprep.subr.mxu0 0.0
        %v556 = vand.u32 %v331, 4294901760
        %v557 = vsub.f32 %v331, %v556
        %558 = vmatpush1.msra.mxu0 %v557
        %559 = vmatprep.subr.mxu0 0.0
        %560 = vmatpush1.msra.mxu0 0.0
        %561 = vmatprep.subr.mxu0 0.0
        %562 = vmatpush1.msra.mxu0 0.0
        %563 = vmatprep.subr.mxu0 0.0
        %564 = vmatpush1.msra.mxu0 0.0
        %565 = vmatprep.subr.mxu0 0.0
        %566 = vmatpush1.msra.mxu0 0.0
        %567 = vmatprep.subr.mxu0 0.0
        %568 = vmatpush1.msra.mxu0 0.0
        %569 = vmatprep.subr.mxu0 0.0
        %570 = vmatpush1.msra.mxu0 0.0
        %571 = vmatprep.subr.mxu0 0.0
        %572 = vmatpush1.msra.mxu0 0.0
        %573 = vmatprep.subr.mxu0 0.0
        %574 = vmatpush1.msra.mxu0 0.0
        %575 = vmatprep.subr.mxu0 0.0
        %576 = vmatpush1.msra.mxu0 0.0
        %577 = vmatprep.subr.mxu0 0.0
        %578 = vmatpush1.msra.mxu0 0.0
        %579 = vmatprep.subr.mxu0 0.0
        %580 = vmatpush1.msra.mxu0 0.0
        %581 = vmatprep.subr.mxu0 0.0
        %582 = vmatpush1.msra.mxu0 0.0
        %583 = vmatprep.subr.mxu0 0.0
        %584 = vmatpush1.msra.mxu0 0.0
        %585 = vmatprep.subr.mxu0 0.0
        %586 = vmatpush1.msra.mxu0 0.0
        %587 = vmatprep.subr.mxu0 0.0
        %588 = vmatpush1.msra.mxu0 0.0
        %589 = vmatprep.subr.mxu0 0.0
        %590 = vmatpush1.msra.mxu0 0.0
        %591 = vmatprep.subr.mxu0 0.0
        %592 = vmatpush1.msra.mxu0 0.0
        %593 = vmatprep.subr.mxu0 0.0
        %594 = vmatpush1.msra.mxu0 0.0
        %595 = vmatprep.subr.mxu0 0.0
        %596 = vmatpush1.msra.mxu0 0.0
        %597 = vmatprep.subr.mxu0 0.0
        %598 = vmatpush1.msra.mxu0 0.0
        %599 = vmatprep.subr.mxu0 0.0
        %600 = vmatpush1.msra.mxu0 0.0
        %601 = vmatprep.subr.mxu0 0.0
        %602 = vmatpush1.msra.mxu0 0.0
        %603 = vmatprep.subr.mxu0 0.0
        %604 = vmatpush1.msra.mxu0 0.0
        %605 = vmatprep.subr.mxu0 0.0
        %606 = vmatpush1.msra.mxu0 0.0
        %607 = vmatprep.subr.mxu0 0.0
        %608 = vmatpush1.msra.mxu0 0.0
        %609 = vmatprep.subr.mxu0 0.0
        %610 = vmatpush1.msra.mxu0 0.0
        %611 = vmatprep.subr.mxu0 0.0
        %612 = vmatpush1.msra.mxu0 0.0
        %613 = vmatprep.subr.mxu0 0.0
        %614 = vmatpush1.msra.mxu0 0.0
        %615 = vmatprep.subr.mxu0 0.0
        %616 = vmatpush1.msra.mxu0 0.0
        %617 = vmatprep.subr.mxu0 0.0
        %618 = vmatpush1.msra.mxu0 0.0
        %619 = vmatprep.mubr.f32.mxu0 0.0
        %v620 = vand.u32 %v334, 4294901760
        %v621 = vsub.f32 %v334, %v620
        %622 = vmatmul.mubr.f32.gmra.mrb[0].mxu0 %v621
        %v623 = vpop.f32.mrb[0].mxu0
        %v624 = vadd.f32 %v530, %v623
        %v625 = vpop.f32.mrb[0].mxu0
        %626 = vmatprep.mubr.f32.mxu0 0.0
        %v627 = vand.u32 %v337, 4294901760
        %v628 = vsub.f32 %v337, %v627
        %629 = vmatmul.mubr.f32.gmra.mrb[0].mxu0 %v628
        %v630 = vpop.f32.mrb[0].mxu0
        %v631 = vadd.f32 %v536, %v630
        %v632 = vpop.f32.mrb[0].mxu0
        %633 = vmatprep.mubr.f32.mxu0 0.0
        %v634 = vand.u32 %v340, 4294901760
        %v635 = vsub.f32 %v340, %v634
        %636 = vmatmul.mubr.f32.gmra.mrb[0].mxu0 %v635
        %v637 = vpop.f32.mrb[0].mxu0
        %v638 = vadd.f32 %v542, %v637
        %v639 = vpop.f32.mrb[0].mxu0
        %640 = vmatprep.mubr.f32.mxu0 0.0
        %v641 = vand.u32 %v343, 4294901760
        %v642 = vsub.f32 %v343, %v641
        %643 = vmatmul.mubr.f32.gmra.mrb[0].mxu0 %v642
        %v644 = vpop.f32.mrb[0].mxu0
        %v645 = vadd.f32 %v548, %v644
        %v646 = vpop.f32.mrb[0].mxu0
        %647 = vdwg.mxu0
        %648 = vmatprep.subr.mxu0 0.0
        %v649 = vand.u32 %v330, 4294901760
        %650 = vmatpush1.msra.mxu0 %v649
        %651 = vmatprep.subr.mxu0 0.0
        %v652 = vand.u32 %v331, 4294901760
        %653 = vmatpush1.msra.mxu0 %v652
        %654 = vmatprep.subr.mxu0 0.0
        %655 = vmatpush1.msra.mxu0 0.0
        %656 = vmatprep.subr.mxu0 0.0
        %657 = vmatpush1.msra.mxu0 0.0
        %658 = vmatprep.subr.mxu0 0.0
        %659 = vmatpush1.msra.mxu0 0.0
        %660 = vmatprep.subr.mxu0 0.0
        %661 = vmatpush1.msra.mxu0 0.0
        %662 = vmatprep.subr.mxu0 0.0
        %663 = vmatpush1.msra.mxu0 0.0
        %664 = vmatprep.subr.mxu0 0.0
        %665 = vmatpush1.msra.mxu0 0.0
        %666 = vmatprep.subr.mxu0 0.0
        %667 = vmatpush1.msra.mxu0 0.0
        %668 = vmatprep.subr.mxu0 0.0
        %669 = vmatpush1.msra.mxu0 0.0
        %670 = vmatprep.subr.mxu0 0.0
        %671 = vmatpush1.msra.mxu0 0.0
        %672 = vmatprep.subr.mxu0 0.0
        %673 = vmatpush1.msra.mxu0 0.0
        %674 = vmatprep.subr.mxu0 0.0
        %675 = vmatpush1.msra.mxu0 0.0
        %676 = vmatprep.subr.mxu0 0.0
        %677 = vmatpush1.msra.mxu0 0.0
        %678 = vmatprep.subr.mxu0 0.0
        %679 = vmatpush1.msra.mxu0 0.0
        %680 = vmatprep.subr.mxu0 0.0
        %681 = vmatpush1.msra.mxu0 0.0
        %682 = vmatprep.subr.mxu0 0.0
        %683 = vmatpush1.msra.mxu0 0.0
        %684 = vmatprep.subr.mxu0 0.0
        %685 = vmatpush1.msra.mxu0 0.0
        %686 = vmatprep.subr.mxu0 0.0
        %687 = vmatpush1.msra.mxu0 0.0
        %688 = vmatprep.subr.mxu0 0.0
        %689 = vmatpush1.msra.mxu0 0.0
        %690 = vmatprep.subr.mxu0 0.0
        %691 = vmatpush1.msra.mxu0 0.0
        %692 = vmatprep.subr.mxu0 0.0
        %693 = vmatpush1.msra.mxu0 0.0
        %694 = vmatprep.subr.mxu0 0.0
        %695 = vmatpush1.msra.mxu0 0.0
        %696 = vmatprep.subr.mxu0 0.0
        %697 = vmatpush1.msra.mxu0 0.0
        %698 = vmatprep.subr.mxu0 0.0
        %699 = vmatpush1.msra.mxu0 0.0
        %700 = vmatprep.subr.mxu0 0.0
        %701 = vmatpush1.msra.mxu0 0.0
        %702 = vmatprep.subr.mxu0 0.0
        %703 = vmatpush1.msra.mxu0 0.0
        %704 = vmatprep.subr.mxu0 0.0
        %705 = vmatpush1.msra.mxu0 0.0
        %706 = vmatprep.subr.mxu0 0.0
        %707 = vmatpush1.msra.mxu0 0.0
        %708 = vmatprep.subr.mxu0 0.0
        %709 = vmatpush1.msra.mxu0 0.0
        %710 = vmatprep.subr.mxu0 0.0
        %711 = vmatpush1.msra.mxu0 0.0
        %712 = vmatprep.subr.mxu0 0.0
        %713 = vmatpush1.msra.mxu0 0.0
        %714 = vmatprep.mubr.f32.mxu0 0.0
        %v715 = vand.u32 %v334, 4294901760
        %v716 = vsub.f32 %v334, %v715
        %v717 = vand.u32 %v716, 4294901760
        %718 = vmatmul.mubr.f32.gmra.mrb[0].mxu0 %v717
        %v719 = vpop.f32.mrb[0].mxu0
        %v720 = vadd.f32 %v624, %v719
        %v721 = vpop.f32.mrb[0].mxu0
        %722 = vmatprep.mubr.f32.mxu0 0.0
        %v723 = vand.u32 %v337, 4294901760
        %v724 = vsub.f32 %v337, %v723
        %v725 = vand.u32 %v724, 4294901760
        %726 = vmatmul.mubr.f32.gmra.mrb[0].mxu0 %v725
        %v727 = vpop.f32.mrb[0].mxu0
        %v728 = vadd.f32 %v631, %v727
        %v729 = vpop.f32.mrb[0].mxu0
        %730 = vmatprep.mubr.f32.mxu0 0.0
        %v731 = vand.u32 %v340, 4294901760
        %v732 = vsub.f32 %v340, %v731
        %v733 = vand.u32 %v732, 4294901760
        %734 = vmatmul.mubr.f32.gmra.mrb[0].mxu0 %v733
        %v735 = vpop.f32.mrb[0].mxu0
        %v736 = vadd.f32 %v638, %v735
        %v737 = vpop.f32.mrb[0].mxu0
        %738 = vmatprep.mubr.f32.mxu0 0.0
        %v739 = vand.u32 %v343, 4294901760
        %v740 = vsub.f32 %v343, %v739
        %v741 = vand.u32 %v740, 4294901760
        %742 = vmatmul.mubr.f32.gmra.mrb[0].mxu0 %v741
        %v743 = vpop.f32.mrb[0].mxu0
        %v744 = vadd.f32 %v645, %v743
        %v745 = vpop.f32.mrb[0].mxu0
        %746 = vdwg.mxu0
        %747 = vmatprep.subr.mxu0 0.0
        %v748 = vand.u32 %v330, 4294901760
        %v749 = vsub.f32 %v330, %v748
        %v750 = vand.u32 %v749, 4294901760
        %751 = vmatpush1.msra.mxu0 %v750
        %752 = vmatprep.subr.mxu0 0.0
        %v753 = vand.u32 %v331, 4294901760
        %v754 = vsub.f32 %v331, %v753
        %v755 = vand.u32 %v754, 4294901760
        %756 = vmatpush1.msra.mxu0 %v755
        %757 = vmatprep.subr.mxu0 0.0
        %758 = vmatpush1.msra.mxu0 0.0
        %759 = vmatprep.subr.mxu0 0.0
        %760 = vmatpush1.msra.mxu0 0.0
        %761 = vmatprep.subr.mxu0 0.0
        %762 = vmatpush1.msra.mxu0 0.0
        %763 = vmatprep.subr.mxu0 0.0
        %764 = vmatpush1.msra.mxu0 0.0
        %765 = vmatprep.subr.mxu0 0.0
        %766 = vmatpush1.msra.mxu0 0.0
        %767 = vmatprep.subr.mxu0 0.0
        %768 = vmatpush1.msra.mxu0 0.0
        %769 = vmatprep.subr.mxu0 0.0
        %770 = vmatpush1.msra.mxu0 0.0
        %771 = vmatprep.subr.mxu0 0.0
        %772 = vmatpush1.msra.mxu0 0.0
        %773 = vmatprep.subr.mxu0 0.0
        %774 = vmatpush1.msra.mxu0 0.0
        %775 = vmatprep.subr.mxu0 0.0
        %776 = vmatpush1.msra.mxu0 0.0
        %777 = vmatprep.subr.mxu0 0.0
        %778 = vmatpush1.msra.mxu0 0.0
        %779 = vmatprep.subr.mxu0 0.0
        %780 = vmatpush1.msra.mxu0 0.0
        %781 = vmatprep.subr.mxu0 0.0
        %782 = vmatpush1.msra.mxu0 0.0
        %783 = vmatprep.subr.mxu0 0.0
        %784 = vmatpush1.msra.mxu0 0.0
        %785 = vmatprep.subr.mxu0 0.0
        %786 = vmatpush1.msra.mxu0 0.0
        %787 = vmatprep.subr.mxu0 0.0
        %788 = vmatpush1.msra.mxu0 0.0
        %789 = vmatprep.subr.mxu0 0.0
        %790 = vmatpush1.msra.mxu0 0.0
        %791 = vmatprep.subr.mxu0 0.0
        %792 = vmatpush1.msra.mxu0 0.0
        %793 = vmatprep.subr.mxu0 0.0
        %794 = vmatpush1.msra.mxu0 0.0
        %795 = vmatprep.subr.mxu0 0.0
        %796 = vmatpush1.msra.mxu0 0.0
        %797 = vmatprep.subr.mxu0 0.0
        %798 = vmatpush1.msra.mxu0 0.0
        %799 = vmatprep.subr.mxu0 0.0
        %800 = vmatpush1.msra.mxu0 0.0
        %801 = vmatprep.subr.mxu0 0.0
        %802 = vmatpush1.msra.mxu0 0.0
        %803 = vmatprep.subr.mxu0 0.0
        %804 = vmatpush1.msra.mxu0 0.0
        %805 = vmatprep.subr.mxu0 0.0
        %806 = vmatpush1.msra.mxu0 0.0
        %807 = vmatprep.subr.mxu0 0.0
        %808 = vmatpush1.msra.mxu0 0.0
        %809 = vmatprep.subr.mxu0 0.0
        %810 = vmatpush1.msra.mxu0 0.0
        %811 = vmatprep.subr.mxu0 0.0
        %812 = vmatpush1.msra.mxu0 0.0
        %813 = vmatprep.subr.mxu0 0.0
        %814 = vmatpush1.msra.mxu0 0.0
        %815 = vmatprep.subr.mxu0 0.0
        %816 = vmatpush1.msra.mxu0 0.0
        %817 = vmatprep.mubr.f32.mxu0 0.0
        %v818 = vand.u32 %v334, 4294901760
        %819 = vmatmul.mubr.f32.gmra.mrb[0].mxu0 %v818
        %v820 = vpop.f32.mrb[0].mxu0
        %v821 = vadd.f32 %v720, %v820
        %v822 = vpop.f32.mrb[0].mxu0
        %823 = vmatprep.mubr.f32.mxu0 0.0
        %v824 = vand.u32 %v337, 4294901760
        %825 = vmatmul.mubr.f32.gmra.mrb[0].mxu0 %v824
        %v826 = vpop.f32.mrb[0].mxu0
        %v827 = vadd.f32 %v728, %v826
        %v828 = vpop.f32.mrb[0].mxu0
        %829 = vmatprep.mubr.f32.mxu0 0.0
        %v830 = vand.u32 %v340, 4294901760
        %831 = vmatmul.mubr.f32.gmra.mrb[0].mxu0 %v830
        %v832 = vpop.f32.mrb[0].mxu0
        %v833 = vadd.f32 %v736, %v832
        %v834 = vpop.f32.mrb[0].mxu0
        %835 = vmatprep.mubr.f32.mxu0 0.0
        %v836 = vand.u32 %v343, 4294901760
        %837 = vmatmul.mubr.f32.gmra.mrb[0].mxu0 %v836
        %v838 = vpop.f32.mrb[0].mxu0
        %v839 = vadd.f32 %v744, %v838
        %v840 = vpop.f32.mrb[0].mxu0
        %841 = vdwg.mxu0
        %842 = vmatprep.subr.mxu0 0.0
        %v843 = vand.u32 %v330, 4294901760
        %844 = vmatpush1.msra.mxu0 %v843
        %845 = vmatprep.subr.mxu0 0.0
        %v846 = vand.u32 %v331, 4294901760
        %847 = vmatpush1.msra.mxu0 %v846
        %848 = vmatprep.subr.mxu0 0.0
        %849 = vmatpush1.msra.mxu0 0.0
        %850 = vmatprep.subr.mxu0 0.0
        %851 = vmatpush1.msra.mxu0 0.0
        %852 = vmatprep.subr.mxu0 0.0
        %853 = vmatpush1.msra.mxu0 0.0
        %854 = vmatprep.subr.mxu0 0.0
        %855 = vmatpush1.msra.mxu0 0.0
        %856 = vmatprep.subr.mxu0 0.0
        %857 = vmatpush1.msra.mxu0 0.0
        %858 = vmatprep.subr.mxu0 0.0
        %859 = vmatpush1.msra.mxu0 0.0
        %860 = vmatprep.subr.mxu0 0.0
        %861 = vmatpush1.msra.mxu0 0.0
        %862 = vmatprep.subr.mxu0 0.0
        %863 = vmatpush1.msra.mxu0 0.0
        %864 = vmatprep.subr.mxu0 0.0
        %865 = vmatpush1.msra.mxu0 0.0
        %866 = vmatprep.subr.mxu0 0.0
        %867 = vmatpush1.msra.mxu0 0.0
        %868 = vmatprep.subr.mxu0 0.0
        %869 = vmatpush1.msra.mxu0 0.0
        %870 = vmatprep.subr.mxu0 0.0
        %871 = vmatpush1.msra.mxu0 0.0
        %872 = vmatprep.subr.mxu0 0.0
        %873 = vmatpush1.msra.mxu0 0.0
        %874 = vmatprep.subr.mxu0 0.0
        %875 = vmatpush1.msra.mxu0 0.0
        %876 = vmatprep.subr.mxu0 0.0
        %877 = vmatpush1.msra.mxu0 0.0
        %878 = vmatprep.subr.mxu0 0.0
        %879 = vmatpush1.msra.mxu0 0.0
        %880 = vmatprep.subr.mxu0 0.0
        %881 = vmatpush1.msra.mxu0 0.0
        %882 = vmatprep.subr.mxu0 0.0
        %883 = vmatpush1.msra.mxu0 0.0
        %884 = vmatprep.subr.mxu0 0.0
        %885 = vmatpush1.msra.mxu0 0.0
        %886 = vmatprep.subr.mxu0 0.0
        %887 = vmatpush1.msra.mxu0 0.0
        %888 = vmatprep.subr.mxu0 0.0
        %889 = vmatpush1.msra.mxu0 0.0
        %890 = vmatprep.subr.mxu0 0.0
        %891 = vmatpush1.msra.mxu0 0.0
        %892 = vmatprep.subr.mxu0 0.0
        %893 = vmatpush1.msra.mxu0 0.0
        %894 = vmatprep.subr.mxu0 0.0
        %895 = vmatpush1.msra.mxu0 0.0
        %896 = vmatprep.subr.mxu0 0.0
        %897 = vmatpush1.msra.mxu0 0.0
        %898 = vmatprep.subr.mxu0 0.0
        %899 = vmatpush1.msra.mxu0 0.0
        %900 = vmatprep.subr.mxu0 0.0
        %901 = vmatpush1.msra.mxu0 0.0
        %902 = vmatprep.subr.mxu0 0.0
        %903 = vmatpush1.msra.mxu0 0.0
        %904 = vmatprep.subr.mxu0 0.0
        %905 = vmatpush1.msra.mxu0 0.0
        %906 = vmatprep.subr.mxu0 0.0
        %907 = vmatpush1.msra.mxu0 0.0
        %908 = vmatprep.mubr.f32.mxu0 0.0
        %v909 = vand.u32 %v334, 4294901760
        %910 = vmatmul.mubr.f32.gmra.mrb[0].mxu0 %v909
        %v911 = vpop.f32.mrb[0].mxu0
        %v912 = vadd.f32 %v821, %v911
        %v913 = vpop.f32.mrb[0].mxu0
        %914 = vmatprep.mubr.f32.mxu0 0.0
        %v915 = vand.u32 %v337, 4294901760
        %916 = vmatmul.mubr.f32.gmra.mrb[0].mxu0 %v915
        %v917 = vpop.f32.mrb[0].mxu0
        %v918 = vadd.f32 %v827, %v917
        %v919 = vpop.f32.mrb[0].mxu0
        %920 = vmatprep.mubr.f32.mxu0 0.0
        %v921 = vand.u32 %v340, 4294901760
        %922 = vmatmul.mubr.f32.gmra.mrb[0].mxu0 %v921
        %v923 = vpop.f32.mrb[0].mxu0
        %v924 = vadd.f32 %v833, %v923
        %v925 = vpop.f32.mrb[0].mxu0
        %926 = vmatprep.mubr.f32.mxu0 0.0
        %v927 = vand.u32 %v343, 4294901760
        %928 = vmatmul.mubr.f32.gmra.mrb[0].mxu0 %v927
        %v929 = vpop.f32.mrb[0].mxu0
        %v930 = vadd.f32 %v839, %v929
        %v931 = vpop.f32.mrb[0].mxu0
        %932 = vdwg.mxu0
        %s933 = scalar_lea.vmem [#allocation2], 16
        %v934 = vld [vmem:[%s933] sm:$0xff]
        %v935 = vld [vmem:[%s933 + $0x8] sm:$0xff]
        %936 = vmatprep.subr.mxu0 0.0
        %v937 = vand.u32 %v934, 4294901760
        %938 = vmatpush1.msra.mxu0 %v937
        %939 = vmatprep.subr.mxu0 0.0
        %v940 = vand.u32 %v935, 4294901760
        %941 = vmatpush1.msra.mxu0 %v940
        %942 = vmatprep.subr.mxu0 0.0
        %943 = vmatpush1.msra.mxu0 0.0
        %944 = vmatprep.subr.mxu0 0.0
        %945 = vmatpush1.msra.mxu0 0.0
        %946 = vmatprep.subr.mxu0 0.0
        %947 = vmatpush1.msra.mxu0 0.0
        %948 = vmatprep.subr.mxu0 0.0
        %949 = vmatpush1.msra.mxu0 0.0
        %950 = vmatprep.subr.mxu0 0.0
        %951 = vmatpush1.msra.mxu0 0.0
        %952 = vmatprep.subr.mxu0 0.0
        %953 = vmatpush1.msra.mxu0 0.0
        %954 = vmatprep.subr.mxu0 0.0
        %955 = vmatpush1.msra.mxu0 0.0
        %956 = vmatprep.subr.mxu0 0.0
        %957 = vmatpush1.msra.mxu0 0.0
        %958 = vmatprep.subr.mxu0 0.0
        %959 = vmatpush1.msra.mxu0 0.0
        %960 = vmatprep.subr.mxu0 0.0
        %961 = vmatpush1.msra.mxu0 0.0
        %962 = vmatprep.subr.mxu0 0.0
        %963 = vmatpush1.msra.mxu0 0.0
        %964 = vmatprep.subr.mxu0 0.0
        %965 = vmatpush1.msra.mxu0 0.0
        %966 = vmatprep.subr.mxu0 0.0
        %967 = vmatpush1.msra.mxu0 0.0
        %968 = vmatprep.subr.mxu0 0.0
        %969 = vmatpush1.msra.mxu0 0.0
        %970 = vmatprep.subr.mxu0 0.0
        %971 = vmatpush1.msra.mxu0 0.0
        %972 = vmatprep.subr.mxu0 0.0
        %973 = vmatpush1.msra.mxu0 0.0
        %974 = vmatprep.subr.mxu0 0.0
        %975 = vmatpush1.msra.mxu0 0.0
        %976 = vmatprep.subr.mxu0 0.0
        %977 = vmatpush1.msra.mxu0 0.0
        %978 = vmatprep.subr.mxu0 0.0
        %979 = vmatpush1.msra.mxu0 0.0
        %980 = vmatprep.subr.mxu0 0.0
        %981 = vmatpush1.msra.mxu0 0.0
        %982 = vmatprep.subr.mxu0 0.0
        %983 = vmatpush1.msra.mxu0 0.0
        %984 = vmatprep.subr.mxu0 0.0
        %985 = vmatpush1.msra.mxu0 0.0
        %986 = vmatprep.subr.mxu0 0.0
        %987 = vmatpush1.msra.mxu0 0.0
        %988 = vmatprep.subr.mxu0 0.0
        %989 = vmatpush1.msra.mxu0 0.0
        %990 = vmatprep.subr.mxu0 0.0
        %991 = vmatpush1.msra.mxu0 0.0
        %992 = vmatprep.subr.mxu0 0.0
        %993 = vmatpush1.msra.mxu0 0.0
        %994 = vmatprep.subr.mxu0 0.0
        %995 = vmatpush1.msra.mxu0 0.0
        %996 = vmatprep.subr.mxu0 0.0
        %997 = vmatpush1.msra.mxu0 0.0
        %998 = vmatprep.subr.mxu0 0.0
        %999 = vmatpush1.msra.mxu0 0.0
        %1000 = vmatprep.subr.mxu0 0.0
        %1001 = vmatpush1.msra.mxu0 0.0
        %1002 = vmatprep.mubr.f32.mxu0 0.0
        %v1003 = vand.u32 %v334, 4294901760
        %v1004 = vsub.f32 %v334, %v1003
        %v1005 = vand.u32 %v1004, 4294901760
        %v1006 = vsub.f32 %v1004, %v1005
        %v1007 = vand.u32 %v1006, 4294901760
        %1008 = vmatmul.mubr.f32.gmra.mrb[0].mxu0 %v1007
        %v1009 = vpop.f32.mrb[0].mxu0
        %v1010 = vadd.f32 0.0, %v1009
        %v1011 = vpop.f32.mrb[0].mxu0
        %1012 = vmatprep.mubr.f32.mxu0 0.0
        %v1013 = vand.u32 %v337, 4294901760
        %v1014 = vsub.f32 %v337, %v1013
        %v1015 = vand.u32 %v1014, 4294901760
        %v1016 = vsub.f32 %v1014, %v1015
        %v1017 = vand.u32 %v1016, 4294901760
        %1018 = vmatmul.mubr.f32.gmra.mrb[0].mxu0 %v1017
        %v1019 = vpop.f32.mrb[0].mxu0
        %v1020 = vadd.f32 0.0, %v1019
        %v1021 = vpop.f32.mrb[0].mxu0
        %1022 = vmatprep.mubr.f32.mxu0 0.0
        %v1023 = vand.u32 %v340, 4294901760
        %v1024 = vsub.f32 %v340, %v1023
        %v1025 = vand.u32 %v1024, 4294901760
        %v1026 = vsub.f32 %v1024, %v1025
        %v1027 = vand.u32 %v1026, 4294901760
        %1028 = vmatmul.mubr.f32.gmra.mrb[0].mxu0 %v1027
        %v1029 = vpop.f32.mrb[0].mxu0
        %v1030 = vadd.f32 0.0, %v1029
        %v1031 = vpop.f32.mrb[0].mxu0
        %1032 = vmatprep.mubr.f32.mxu0 0.0
        %v1033 = vand.u32 %v343, 4294901760
        %v1034 = vsub.f32 %v343, %v1033
        %v1035 = vand.u32 %v1034, 4294901760
        %v1036 = vsub.f32 %v1034, %v1035
        %v1037 = vand.u32 %v1036, 4294901760
        %1038 = vmatmul.mubr.f32.gmra.mrb[0].mxu0 %v1037
        %v1039 = vpop.f32.mrb[0].mxu0
        %v1040 = vadd.f32 0.0, %v1039
        %v1041 = vpop.f32.mrb[0].mxu0
        %1042 = vdwg.mxu0
        %1043 = vmatprep.subr.mxu0 0.0
        %v1044 = vand.u32 %v934, 4294901760
        %v1045 = vsub.f32 %v934, %v1044
        %v1046 = vand.u32 %v1045, 4294901760
        %v1047 = vsub.f32 %v1045, %v1046
        %v1048 = vand.u32 %v1047, 4294901760
        %1049 = vmatpush1.msra.mxu0 %v1048
        %1050 = vmatprep.subr.mxu0 0.0
        %v1051 = vand.u32 %v935, 4294901760
        %v1052 = vsub.f32 %v935, %v1051
        %v1053 = vand.u32 %v1052, 4294901760
        %v1054 = vsub.f32 %v1052, %v1053
        %v1055 = vand.u32 %v1054, 4294901760
        %1056 = vmatpush1.msra.mxu0 %v1055
        %1057 = vmatprep.subr.mxu0 0.0
        %1058 = vmatpush1.msra.mxu0 0.0
        %1059 = vmatprep.subr.mxu0 0.0
        %1060 = vmatpush1.msra.mxu0 0.0
        %1061 = vmatprep.subr.mxu0 0.0
        %1062 = vmatpush1.msra.mxu0 0.0
        %1063 = vmatprep.subr.mxu0 0.0
        %1064 = vmatpush1.msra.mxu0 0.0
        %1065 = vmatprep.subr.mxu0 0.0
        %1066 = vmatpush1.msra.mxu0 0.0
        %1067 = vmatprep.subr.mxu0 0.0
        %1068 = vmatpush1.msra.mxu0 0.0
        %1069 = vmatprep.subr.mxu0 0.0
        %1070 = vmatpush1.msra.mxu0 0.0
        %1071 = vmatprep.subr.mxu0 0.0
        %1072 = vmatpush1.msra.mxu0 0.0
        %1073 = vmatprep.subr.mxu0 0.0
        %1074 = vmatpush1.msra.mxu0 0.0
        %1075 = vmatprep.subr.mxu0 0.0
        %1076 = vmatpush1.msra.mxu0 0.0
        %1077 = vmatprep.subr.mxu0 0.0
        %1078 = vmatpush1.msra.mxu0 0.0
        %1079 = vmatprep.subr.mxu0 0.0
        %1080 = vmatpush1.msra.mxu0 0.0
        %1081 = vmatprep.subr.mxu0 0.0
        %1082 = vmatpush1.msra.mxu0 0.0
        %1083 = vmatprep.subr.mxu0 0.0
        %1084 = vmatpush1.msra.mxu0 0.0
        %1085 = vmatprep.subr.mxu0 0.0
        %1086 = vmatpush1.msra.mxu0 0.0
        %1087 = vmatprep.subr.mxu0 0.0
        %1088 = vmatpush1.msra.mxu0 0.0
        %1089 = vmatprep.subr.mxu0 0.0
        %1090 = vmatpush1.msra.mxu0 0.0
        %1091 = vmatprep.subr.mxu0 0.0
        %1092 = vmatpush1.msra.mxu0 0.0
        %1093 = vmatprep.subr.mxu0 0.0
        %1094 = vmatpush1.msra.mxu0 0.0
        %1095 = vmatprep.subr.mxu0 0.0
        %1096 = vmatpush1.msra.mxu0 0.0
        %1097 = vmatprep.subr.mxu0 0.0
        %1098 = vmatpush1.msra.mxu0 0.0
        %1099 = vmatprep.subr.mxu0 0.0
        %1100 = vmatpush1.msra.mxu0 0.0
        %1101 = vmatprep.subr.mxu0 0.0
        %1102 = vmatpush1.msra.mxu0 0.0
        %1103 = vmatprep.subr.mxu0 0.0
        %1104 = vmatpush1.msra.mxu0 0.0
        %1105 = vmatprep.subr.mxu0 0.0
        %1106 = vmatpush1.msra.mxu0 0.0
        %1107 = vmatprep.subr.mxu0 0.0
        %1108 = vmatpush1.msra.mxu0 0.0
        %1109 = vmatprep.subr.mxu0 0.0
        %1110 = vmatpush1.msra.mxu0 0.0
        %1111 = vmatprep.subr.mxu0 0.0
        %1112 = vmatpush1.msra.mxu0 0.0
        %1113 = vmatprep.subr.mxu0 0.0
        %1114 = vmatpush1.msra.mxu0 0.0
        %1115 = vmatprep.subr.mxu0 0.0
        %1116 = vmatpush1.msra.mxu0 0.0
        %1117 = vmatprep.mubr.f32.mxu0 0.0
        %v1118 = vand.u32 %v334, 4294901760
        %1119 = vmatmul.mubr.f32.gmra.mrb[0].mxu0 %v1118
        %v1120 = vpop.f32.mrb[0].mxu0
        %v1121 = vadd.f32 %v1010, %v1120
        %v1122 = vpop.f32.mrb[0].mxu0
        %1123 = vmatprep.mubr.f32.mxu0 0.0
        %v1124 = vand.u32 %v337, 4294901760
        %1125 = vmatmul.mubr.f32.gmra.mrb[0].mxu0 %v1124
        %v1126 = vpop.f32.mrb[0].mxu0
        %v1127 = vadd.f32 %v1020, %v1126
        %v1128 = vpop.f32.mrb[0].mxu0
        %1129 = vmatprep.mubr.f32.mxu0 0.0
        %v1130 = vand.u32 %v340, 4294901760
        %1131 = vmatmul.mubr.f32.gmra.mrb[0].mxu0 %v1130
        %v1132 = vpop.f32.mrb[0].mxu0
        %v1133 = vadd.f32 %v1030, %v1132
        %v1134 = vpop.f32.mrb[0].mxu0
        %1135 = vmatprep.mubr.f32.mxu0 0.0
        %v1136 = vand.u32 %v343, 4294901760
        %1137 = vmatmul.mubr.f32.gmra.mrb[0].mxu0 %v1136
        %v1138 = vpop.f32.mrb[0].mxu0
        %v1139 = vadd.f32 %v1040, %v1138
        %v1140 = vpop.f32.mrb[0].mxu0
        %1141 = vdwg.mxu0
        %1142 = vmatprep.subr.mxu0 0.0
        %v1143 = vand.u32 %v934, 4294901760
        %v1144 = vsub.f32 %v934, %v1143
        %1145 = vmatpush1.msra.mxu0 %v1144
        %1146 = vmatprep.subr.mxu0 0.0
        %v1147 = vand.u32 %v935, 4294901760
        %v1148 = vsub.f32 %v935, %v1147
        %1149 = vmatpush1.msra.mxu0 %v1148
        %1150 = vmatprep.subr.mxu0 0.0
        %1151 = vmatpush1.msra.mxu0 0.0
        %1152 = vmatprep.subr.mxu0 0.0
        %1153 = vmatpush1.msra.mxu0 0.0
        %1154 = vmatprep.subr.mxu0 0.0
        %1155 = vmatpush1.msra.mxu0 0.0
        %1156 = vmatprep.subr.mxu0 0.0
        %1157 = vmatpush1.msra.mxu0 0.0
        %1158 = vmatprep.subr.mxu0 0.0
        %1159 = vmatpush1.msra.mxu0 0.0
        %1160 = vmatprep.subr.mxu0 0.0
        %1161 = vmatpush1.msra.mxu0 0.0
        %1162 = vmatprep.subr.mxu0 0.0
        %1163 = vmatpush1.msra.mxu0 0.0
        %1164 = vmatprep.subr.mxu0 0.0
        %1165 = vmatpush1.msra.mxu0 0.0
        %1166 = vmatprep.subr.mxu0 0.0
        %1167 = vmatpush1.msra.mxu0 0.0
        %1168 = vmatprep.subr.mxu0 0.0
        %1169 = vmatpush1.msra.mxu0 0.0
        %1170 = vmatprep.subr.mxu0 0.0
        %1171 = vmatpush1.msra.mxu0 0.0
        %1172 = vmatprep.subr.mxu0 0.0
        %1173 = vmatpush1.msra.mxu0 0.0
        %1174 = vmatprep.subr.mxu0 0.0
        %1175 = vmatpush1.msra.mxu0 0.0
        %1176 = vmatprep.subr.mxu0 0.0
        %1177 = vmatpush1.msra.mxu0 0.0
        %1178 = vmatprep.subr.mxu0 0.0
        %1179 = vmatpush1.msra.mxu0 0.0
        %1180 = vmatprep.subr.mxu0 0.0
        %1181 = vmatpush1.msra.mxu0 0.0
        %1182 = vmatprep.subr.mxu0 0.0
        %1183 = vmatpush1.msra.mxu0 0.0
        %1184 = vmatprep.subr.mxu0 0.0
        %1185 = vmatpush1.msra.mxu0 0.0
        %1186 = vmatprep.subr.mxu0 0.0
        %1187 = vmatpush1.msra.mxu0 0.0
        %1188 = vmatprep.subr.mxu0 0.0
        %1189 = vmatpush1.msra.mxu0 0.0
        %1190 = vmatprep.subr.mxu0 0.0
        %1191 = vmatpush1.msra.mxu0 0.0
        %1192 = vmatprep.subr.mxu0 0.0
        %1193 = vmatpush1.msra.mxu0 0.0
        %1194 = vmatprep.subr.mxu0 0.0
        %1195 = vmatpush1.msra.mxu0 0.0
        %1196 = vmatprep.subr.mxu0 0.0
        %1197 = vmatpush1.msra.mxu0 0.0
        %1198 = vmatprep.subr.mxu0 0.0
        %1199 = vmatpush1.msra.mxu0 0.0
        %1200 = vmatprep.subr.mxu0 0.0
        %1201 = vmatpush1.msra.mxu0 0.0
        %1202 = vmatprep.subr.mxu0 0.0
        %1203 = vmatpush1.msra.mxu0 0.0
        %1204 = vmatprep.subr.mxu0 0.0
        %1205 = vmatpush1.msra.mxu0 0.0
        %1206 = vmatprep.subr.mxu0 0.0
        %1207 = vmatpush1.msra.mxu0 0.0
        %1208 = vmatprep.subr.mxu0 0.0
        %1209 = vmatpush1.msra.mxu0 0.0
        %1210 = vmatprep.mubr.f32.mxu0 0.0
        %v1211 = vand.u32 %v334, 4294901760
        %v1212 = vsub.f32 %v334, %v1211
        %1213 = vmatmul.mubr.f32.gmra.mrb[0].mxu0 %v1212
        %v1214 = vpop.f32.mrb[0].mxu0
        %v1215 = vadd.f32 %v1121, %v1214
        %v1216 = vpop.f32.mrb[0].mxu0
        %1217 = vmatprep.mubr.f32.mxu0 0.0
        %v1218 = vand.u32 %v337, 4294901760
        %v1219 = vsub.f32 %v337, %v1218
        %1220 = vmatmul.mubr.f32.gmra.mrb[0].mxu0 %v1219
        %v1221 = vpop.f32.mrb[0].mxu0
        %v1222 = vadd.f32 %v1127, %v1221
        %v1223 = vpop.f32.mrb[0].mxu0
        %1224 = vmatprep.mubr.f32.mxu0 0.0
        %v1225 = vand.u32 %v340, 4294901760
        %v1226 = vsub.f32 %v340, %v1225
        %1227 = vmatmul.mubr.f32.gmra.mrb[0].mxu0 %v1226
        %v1228 = vpop.f32.mrb[0].mxu0
        %v1229 = vadd.f32 %v1133, %v1228
        %v1230 = vpop.f32.mrb[0].mxu0
        %1231 = vmatprep.mubr.f32.mxu0 0.0
        %v1232 = vand.u32 %v343, 4294901760
        %v1233 = vsub.f32 %v343, %v1232
        %1234 = vmatmul.mubr.f32.gmra.mrb[0].mxu0 %v1233
        %v1235 = vpop.f32.mrb[0].mxu0
        %v1236 = vadd.f32 %v1139, %v1235
        %v1237 = vpop.f32.mrb[0].mxu0
        %1238 = vdwg.mxu0
        %1239 = vmatprep.subr.mxu0 0.0
        %v1240 = vand.u32 %v934, 4294901760
        %1241 = vmatpush1.msra.mxu0 %v1240
        %1242 = vmatprep.subr.mxu0 0.0
        %v1243 = vand.u32 %v935, 4294901760
        %1244 = vmatpush1.msra.mxu0 %v1243
        %1245 = vmatprep.subr.mxu0 0.0
        %1246 = vmatpush1.msra.mxu0 0.0
        %1247 = vmatprep.subr.mxu0 0.0
        %1248 = vmatpush1.msra.mxu0 0.0
        %1249 = vmatprep.subr.mxu0 0.0
        %1250 = vmatpush1.msra.mxu0 0.0
        %1251 = vmatprep.subr.mxu0 0.0
        %1252 = vmatpush1.msra.mxu0 0.0
        %1253 = vmatprep.subr.mxu0 0.0
        %1254 = vmatpush1.msra.mxu0 0.0
        %1255 = vmatprep.subr.mxu0 0.0
        %1256 = vmatpush1.msra.mxu0 0.0
        %1257 = vmatprep.subr.mxu0 0.0
        %1258 = vmatpush1.msra.mxu0 0.0
        %1259 = vmatprep.subr.mxu0 0.0
        %1260 = vmatpush1.msra.mxu0 0.0
        %1261 = vmatprep.subr.mxu0 0.0
        %1262 = vmatpush1.msra.mxu0 0.0
        %1263 = vmatprep.subr.mxu0 0.0
        %1264 = vmatpush1.msra.mxu0 0.0
        %1265 = vmatprep.subr.mxu0 0.0
        %1266 = vmatpush1.msra.mxu0 0.0
        %1267 = vmatprep.subr.mxu0 0.0
        %1268 = vmatpush1.msra.mxu0 0.0
        %1269 = vmatprep.subr.mxu0 0.0
        %1270 = vmatpush1.msra.mxu0 0.0
        %1271 = vmatprep.subr.mxu0 0.0
        %1272 = vmatpush1.msra.mxu0 0.0
        %1273 = vmatprep.subr.mxu0 0.0
        %1274 = vmatpush1.msra.mxu0 0.0
        %1275 = vmatprep.subr.mxu0 0.0
        %1276 = vmatpush1.msra.mxu0 0.0
        %1277 = vmatprep.subr.mxu0 0.0
        %1278 = vmatpush1.msra.mxu0 0.0
        %1279 = vmatprep.subr.mxu0 0.0
        %1280 = vmatpush1.msra.mxu0 0.0
        %1281 = vmatprep.subr.mxu0 0.0
        %1282 = vmatpush1.msra.mxu0 0.0
        %1283 = vmatprep.subr.mxu0 0.0
        %1284 = vmatpush1.msra.mxu0 0.0
        %1285 = vmatprep.subr.mxu0 0.0
        %1286 = vmatpush1.msra.mxu0 0.0
        %1287 = vmatprep.subr.mxu0 0.0
        %1288 = vmatpush1.msra.mxu0 0.0
        %1289 = vmatprep.subr.mxu0 0.0
        %1290 = vmatpush1.msra.mxu0 0.0
        %1291 = vmatprep.subr.mxu0 0.0
        %1292 = vmatpush1.msra.mxu0 0.0
        %1293 = vmatprep.subr.mxu0 0.0
        %1294 = vmatpush1.msra.mxu0 0.0
        %1295 = vmatprep.subr.mxu0 0.0
        %1296 = vmatpush1.msra.mxu0 0.0
        %1297 = vmatprep.subr.mxu0 0.0
        %1298 = vmatpush1.msra.mxu0 0.0
        %1299 = vmatprep.subr.mxu0 0.0
        %1300 = vmatpush1.msra.mxu0 0.0
        %1301 = vmatprep.subr.mxu0 0.0
        %1302 = vmatpush1.msra.mxu0 0.0
        %1303 = vmatprep.subr.mxu0 0.0
        %1304 = vmatpush1.msra.mxu0 0.0
        %1305 = vmatprep.mubr.f32.mxu0 0.0
        %v1306 = vand.u32 %v334, 4294901760
        %v1307 = vsub.f32 %v334, %v1306
        %v1308 = vand.u32 %v1307, 4294901760
        %1309 = vmatmul.mubr.f32.gmra.mrb[0].mxu0 %v1308
        %v1310 = vpop.f32.mrb[0].mxu0
        %v1311 = vadd.f32 %v1215, %v1310
        %v1312 = vpop.f32.mrb[0].mxu0
        %1313 = vmatprep.mubr.f32.mxu0 0.0
        %v1314 = vand.u32 %v337, 4294901760
        %v1315 = vsub.f32 %v337, %v1314
        %v1316 = vand.u32 %v1315, 4294901760
        %1317 = vmatmul.mubr.f32.gmra.mrb[0].mxu0 %v1316
        %v1318 = vpop.f32.mrb[0].mxu0
        %v1319 = vadd.f32 %v1222, %v1318
        %v1320 = vpop.f32.mrb[0].mxu0
        %1321 = vmatprep.mubr.f32.mxu0 0.0
        %v1322 = vand.u32 %v340, 4294901760
        %v1323 = vsub.f32 %v340, %v1322
        %v1324 = vand.u32 %v1323, 4294901760
        %1325 = vmatmul.mubr.f32.gmra.mrb[0].mxu0 %v1324
        %v1326 = vpop.f32.mrb[0].mxu0
        %v1327 = vadd.f32 %v1229, %v1326
        %v1328 = vpop.f32.mrb[0].mxu0
        %1329 = vmatprep.mubr.f32.mxu0 0.0
        %v1330 = vand.u32 %v343, 4294901760
        %v1331 = vsub.f32 %v343, %v1330
        %v1332 = vand.u32 %v1331, 4294901760
        %1333 = vmatmul.mubr.f32.gmra.mrb[0].mxu0 %v1332
        %v1334 = vpop.f32.mrb[0].mxu0
        %v1335 = vadd.f32 %v1236, %v1334
        %v1336 = vpop.f32.mrb[0].mxu0
        %1337 = vdwg.mxu0
        %1338 = vmatprep.subr.mxu0 0.0
        %v1339 = vand.u32 %v934, 4294901760
        %v1340 = vsub.f32 %v934, %v1339
        %v1341 = vand.u32 %v1340, 4294901760
        %1342 = vmatpush1.msra.mxu0 %v1341
        %1343 = vmatprep.subr.mxu0 0.0
        %v1344 = vand.u32 %v935, 4294901760
        %v1345 = vsub.f32 %v935, %v1344
        %v1346 = vand.u32 %v1345, 4294901760
        %1347 = vmatpush1.msra.mxu0 %v1346
        %1348 = vmatprep.subr.mxu0 0.0
        %1349 = vmatpush1.msra.mxu0 0.0
        %1350 = vmatprep.subr.mxu0 0.0
        %1351 = vmatpush1.msra.mxu0 0.0
        %1352 = vmatprep.subr.mxu0 0.0
        %1353 = vmatpush1.msra.mxu0 0.0
        %1354 = vmatprep.subr.mxu0 0.0
        %1355 = vmatpush1.msra.mxu0 0.0
        %1356 = vmatprep.subr.mxu0 0.0
        %1357 = vmatpush1.msra.mxu0 0.0
        %1358 = vmatprep.subr.mxu0 0.0
        %1359 = vmatpush1.msra.mxu0 0.0
        %1360 = vmatprep.subr.mxu0 0.0
        %1361 = vmatpush1.msra.mxu0 0.0
        %1362 = vmatprep.subr.mxu0 0.0
        %1363 = vmatpush1.msra.mxu0 0.0
        %1364 = vmatprep.subr.mxu0 0.0
        %1365 = vmatpush1.msra.mxu0 0.0
        %1366 = vmatprep.subr.mxu0 0.0
        %1367 = vmatpush1.msra.mxu0 0.0
        %1368 = vmatprep.subr.mxu0 0.0
        %1369 = vmatpush1.msra.mxu0 0.0
        %1370 = vmatprep.subr.mxu0 0.0
        %1371 = vmatpush1.msra.mxu0 0.0
        %1372 = vmatprep.subr.mxu0 0.0
        %1373 = vmatpush1.msra.mxu0 0.0
        %1374 = vmatprep.subr.mxu0 0.0
        %1375 = vmatpush1.msra.mxu0 0.0
        %1376 = vmatprep.subr.mxu0 0.0
        %1377 = vmatpush1.msra.mxu0 0.0
        %1378 = vmatprep.subr.mxu0 0.0
        %1379 = vmatpush1.msra.mxu0 0.0
        %1380 = vmatprep.subr.mxu0 0.0
        %1381 = vmatpush1.msra.mxu0 0.0
        %1382 = vmatprep.subr.mxu0 0.0
        %1383 = vmatpush1.msra.mxu0 0.0
        %1384 = vmatprep.subr.mxu0 0.0
        %1385 = vmatpush1.msra.mxu0 0.0
        %1386 = vmatprep.subr.mxu0 0.0
        %1387 = vmatpush1.msra.mxu0 0.0
        %1388 = vmatprep.subr.mxu0 0.0
        %1389 = vmatpush1.msra.mxu0 0.0
        %1390 = vmatprep.subr.mxu0 0.0
        %1391 = vmatpush1.msra.mxu0 0.0
        %1392 = vmatprep.subr.mxu0 0.0
        %1393 = vmatpush1.msra.mxu0 0.0
        %1394 = vmatprep.subr.mxu0 0.0
        %1395 = vmatpush1.msra.mxu0 0.0
        %1396 = vmatprep.subr.mxu0 0.0
        %1397 = vmatpush1.msra.mxu0 0.0
        %1398 = vmatprep.subr.mxu0 0.0
        %1399 = vmatpush1.msra.mxu0 0.0
        %1400 = vmatprep.subr.mxu0 0.0
        %1401 = vmatpush1.msra.mxu0 0.0
        %1402 = vmatprep.subr.mxu0 0.0
        %1403 = vmatpush1.msra.mxu0 0.0
        %1404 = vmatprep.subr.mxu0 0.0
        %1405 = vmatpush1.msra.mxu0 0.0
        %1406 = vmatprep.subr.mxu0 0.0
        %1407 = vmatpush1.msra.mxu0 0.0
        %1408 = vmatprep.mubr.f32.mxu0 0.0
        %v1409 = vand.u32 %v334, 4294901760
        %1410 = vmatmul.mubr.f32.gmra.mrb[0].mxu0 %v1409
        %v1411 = vpop.f32.mrb[0].mxu0
        %v1412 = vadd.f32 %v1311, %v1411
        %v1413 = vpop.f32.mrb[0].mxu0
        %1414 = vmatprep.mubr.f32.mxu0 0.0
        %v1415 = vand.u32 %v337, 4294901760
        %1416 = vmatmul.mubr.f32.gmra.mrb[0].mxu0 %v1415
        %v1417 = vpop.f32.mrb[0].mxu0
        %v1418 = vadd.f32 %v1319, %v1417
        %v1419 = vpop.f32.mrb[0].mxu0
        %1420 = vmatprep.mubr.f32.mxu0 0.0
        %v1421 = vand.u32 %v340, 4294901760
        %1422 = vmatmul.mubr.f32.gmra.mrb[0].mxu0 %v1421
        %v1423 = vpop.f32.mrb[0].mxu0
        %v1424 = vadd.f32 %v1327, %v1423
        %v1425 = vpop.f32.mrb[0].mxu0
        %1426 = vmatprep.mubr.f32.mxu0 0.0
        %v1427 = vand.u32 %v343, 4294901760
        %1428 = vmatmul.mubr.f32.gmra.mrb[0].mxu0 %v1427
        %v1429 = vpop.f32.mrb[0].mxu0
        %v1430 = vadd.f32 %v1335, %v1429
        %v1431 = vpop.f32.mrb[0].mxu0
        %1432 = vdwg.mxu0
        %1433 = vmatprep.subr.mxu0 0.0
        %v1434 = vand.u32 %v934, 4294901760
        %1435 = vmatpush1.msra.mxu0 %v1434
        %1436 = vmatprep.subr.mxu0 0.0
        %v1437 = vand.u32 %v935, 4294901760
        %1438 = vmatpush1.msra.mxu0 %v1437
        %1439 = vmatprep.subr.mxu0 0.0
        %1440 = vmatpush1.msra.mxu0 0.0
        %1441 = vmatprep.subr.mxu0 0.0
        %1442 = vmatpush1.msra.mxu0 0.0
        %1443 = vmatprep.subr.mxu0 0.0
        %1444 = vmatpush1.msra.mxu0 0.0
        %1445 = vmatprep.subr.mxu0 0.0
        %1446 = vmatpush1.msra.mxu0 0.0
        %1447 = vmatprep.subr.mxu0 0.0
        %1448 = vmatpush1.msra.mxu0 0.0
        %1449 = vmatprep.subr.mxu0 0.0
        %1450 = vmatpush1.msra.mxu0 0.0
        %1451 = vmatprep.subr.mxu0 0.0
        %1452 = vmatpush1.msra.mxu0 0.0
        %1453 = vmatprep.subr.mxu0 0.0
        %1454 = vmatpush1.msra.mxu0 0.0
        %1455 = vmatprep.subr.mxu0 0.0
        %1456 = vmatpush1.msra.mxu0 0.0
        %1457 = vmatprep.subr.mxu0 0.0
        %1458 = vmatpush1.msra.mxu0 0.0
        %1459 = vmatprep.subr.mxu0 0.0
        %1460 = vmatpush1.msra.mxu0 0.0
        %1461 = vmatprep.subr.mxu0 0.0
        %1462 = vmatpush1.msra.mxu0 0.0
        %1463 = vmatprep.subr.mxu0 0.0
        %1464 = vmatpush1.msra.mxu0 0.0
        %1465 = vmatprep.subr.mxu0 0.0
        %1466 = vmatpush1.msra.mxu0 0.0
        %1467 = vmatprep.subr.mxu0 0.0
        %1468 = vmatpush1.msra.mxu0 0.0
        %1469 = vmatprep.subr.mxu0 0.0
        %1470 = vmatpush1.msra.mxu0 0.0
        %1471 = vmatprep.subr.mxu0 0.0
        %1472 = vmatpush1.msra.mxu0 0.0
        %1473 = vmatprep.subr.mxu0 0.0
        %1474 = vmatpush1.msra.mxu0 0.0
        %1475 = vmatprep.subr.mxu0 0.0
        %1476 = vmatpush1.msra.mxu0 0.0
        %1477 = vmatprep.subr.mxu0 0.0
        %1478 = vmatpush1.msra.mxu0 0.0
        %1479 = vmatprep.subr.mxu0 0.0
        %1480 = vmatpush1.msra.mxu0 0.0
        %1481 = vmatprep.subr.mxu0 0.0
        %1482 = vmatpush1.msra.mxu0 0.0
        %1483 = vmatprep.subr.mxu0 0.0
        %1484 = vmatpush1.msra.mxu0 0.0
        %1485 = vmatprep.subr.mxu0 0.0
        %1486 = vmatpush1.msra.mxu0 0.0
        %1487 = vmatprep.subr.mxu0 0.0
        %1488 = vmatpush1.msra.mxu0 0.0
        %1489 = vmatprep.subr.mxu0 0.0
        %1490 = vmatpush1.msra.mxu0 0.0
        %1491 = vmatprep.subr.mxu0 0.0
        %1492 = vmatpush1.msra.mxu0 0.0
        %1493 = vmatprep.subr.mxu0 0.0
        %1494 = vmatpush1.msra.mxu0 0.0
        %1495 = vmatprep.subr.mxu0 0.0
        %1496 = vmatpush1.msra.mxu0 0.0
        %1497 = vmatprep.subr.mxu0 0.0
        %1498 = vmatpush1.msra.mxu0 0.0
        %1499 = vmatprep.mubr.f32.mxu0 0.0
        %v1500 = vand.u32 %v334, 4294901760
        %1501 = vmatmul.mubr.f32.gmra.mrb[0].mxu0 %v1500
        %v1502 = vpop.f32.mrb[0].mxu0
        %v1503 = vadd.f32 %v1412, %v1502
        %v1504 = vpop.f32.mrb[0].mxu0
        %1505 = vmatprep.mubr.f32.mxu0 0.0
        %v1506 = vand.u32 %v337, 4294901760
        %1507 = vmatmul.mubr.f32.gmra.mrb[0].mxu0 %v1506
        %v1508 = vpop.f32.mrb[0].mxu0
        %v1509 = vadd.f32 %v1418, %v1508
        %v1510 = vpop.f32.mrb[0].mxu0
        %1511 = vmatprep.mubr.f32.mxu0 0.0
        %v1512 = vand.u32 %v340, 4294901760
        %1513 = vmatmul.mubr.f32.gmra.mrb[0].mxu0 %v1512
        %v1514 = vpop.f32.mrb[0].mxu0
        %v1515 = vadd.f32 %v1424, %v1514
        %v1516 = vpop.f32.mrb[0].mxu0
        %1517 = vmatprep.mubr.f32.mxu0 0.0
        %v1518 = vand.u32 %v343, 4294901760
        %1519 = vmatmul.mubr.f32.gmra.mrb[0].mxu0 %v1518
        %v1520 = vpop.f32.mrb[0].mxu0
        %v1521 = vadd.f32 %v1430, %v1520
        %v1522 = vpop.f32.mrb[0].mxu0
        %1523 = vdwg.mxu0
        %v1524 = vmax.f32 %v912, %v1503
        %v1525 = vmax.f32 %v918, %v1509
        %v1526 = vmax.f32 %v924, %v1515
        %v1527 = vmax.f32 %v930, %v1521
        %s1528 = scalar_lea.vmem [#allocation2], 32
        %v1529 = vld [vmem:[%s1528] sm:$0xff]
        %v1530 = vld [vmem:[%s1528 + $0x8] sm:$0xff]
        %1531 = vmatprep.subr.mxu0 0.0
        %v1532 = vand.u32 %v1529, 4294901760
        %1533 = vmatpush1.msra.mxu0 %v1532
        %1534 = vmatprep.subr.mxu0 0.0
        %v1535 = vand.u32 %v1530, 4294901760
        %1536 = vmatpush1.msra.mxu0 %v1535
        %1537 = vmatprep.subr.mxu0 0.0
        %1538 = vmatpush1.msra.mxu0 0.0
        %1539 = vmatprep.subr.mxu0 0.0
        %1540 = vmatpush1.msra.mxu0 0.0
        %1541 = vmatprep.subr.mxu0 0.0
        %1542 = vmatpush1.msra.mxu0 0.0
        %1543 = vmatprep.subr.mxu0 0.0
        %1544 = vmatpush1.msra.mxu0 0.0
        %1545 = vmatprep.subr.mxu0 0.0
        %1546 = vmatpush1.msra.mxu0 0.0
        %1547 = vmatprep.subr.mxu0 0.0
        %1548 = vmatpush1.msra.mxu0 0.0
        %1549 = vmatprep.subr.mxu0 0.0
        %1550 = vmatpush1.msra.mxu0 0.0
        %1551 = vmatprep.subr.mxu0 0.0
        %1552 = vmatpush1.msra.mxu0 0.0
        %1553 = vmatprep.subr.mxu0 0.0
        %1554 = vmatpush1.msra.mxu0 0.0
        %1555 = vmatprep.subr.mxu0 0.0
        %1556 = vmatpush1.msra.mxu0 0.0
        %1557 = vmatprep.subr.mxu0 0.0
        %1558 = vmatpush1.msra.mxu0 0.0
        %1559 = vmatprep.subr.mxu0 0.0
        %1560 = vmatpush1.msra.mxu0 0.0
        %1561 = vmatprep.subr.mxu0 0.0
        %1562 = vmatpush1.msra.mxu0 0.0
        %1563 = vmatprep.subr.mxu0 0.0
        %1564 = vmatpush1.msra.mxu0 0.0
        %1565 = vmatprep.subr.mxu0 0.0
        %1566 = vmatpush1.msra.mxu0 0.0
        %1567 = vmatprep.subr.mxu0 0.0
        %1568 = vmatpush1.msra.mxu0 0.0
        %1569 = vmatprep.subr.mxu0 0.0
        %1570 = vmatpush1.msra.mxu0 0.0
        %1571 = vmatprep.subr.mxu0 0.0
        %1572 = vmatpush1.msra.mxu0 0.0
        %1573 = vmatprep.subr.mxu0 0.0
        %1574 = vmatpush1.msra.mxu0 0.0
        %1575 = vmatprep.subr.mxu0 0.0
        %1576 = vmatpush1.msra.mxu0 0.0
        %1577 = vmatprep.subr.mxu0 0.0
        %1578 = vmatpush1.msra.mxu0 0.0
        %1579 = vmatprep.subr.mxu0 0.0
        %1580 = vmatpush1.msra.mxu0 0.0
        %1581 = vmatprep.subr.mxu0 0.0
        %1582 = vmatpush1.msra.mxu0 0.0
        %1583 = vmatprep.subr.mxu0 0.0
        %1584 = vmatpush1.msra.mxu0 0.0
        %1585 = vmatprep.subr.mxu0 0.0
        %1586 = vmatpush1.msra.mxu0 0.0
        %1587 = vmatprep.subr.mxu0 0.0
        %1588 = vmatpush1.msra.mxu0 0.0
        %1589 = vmatprep.subr.mxu0 0.0
        %1590 = vmatpush1.msra.mxu0 0.0
        %1591 = vmatprep.subr.mxu0 0.0
        %1592 = vmatpush1.msra.mxu0 0.0
        %1593 = vmatprep.subr.mxu0 0.0
        %1594 = vmatpush1.msra.mxu0 0.0
        %1595 = vmatprep.subr.mxu0 0.0
        %1596 = vmatpush1.msra.mxu0 0.0
        %1597 = vmatprep.mubr.f32.mxu0 0.0
        %v1598 = vand.u32 %v334, 4294901760
        %v1599 = vsub.f32 %v334, %v1598
        %v1600 = vand.u32 %v1599, 4294901760
        %v1601 = vsub.f32 %v1599, %v1600
        %v1602 = vand.u32 %v1601, 4294901760
        %1603 = vmatmul.mubr.f32.gmra.mrb[0].mxu0 %v1602
        %v1604 = vpop.f32.mrb[0].mxu0
        %v1605 = vadd.f32 0.0, %v1604
        %v1606 = vpop.f32.mrb[0].mxu0
        %1607 = vmatprep.mubr.f32.mxu0 0.0
        %v1608 = vand.u32 %v337, 4294901760
        %v1609 = vsub.f32 %v337, %v1608
        %v1610 = vand.u32 %v1609, 4294901760
        %v1611 = vsub.f32 %v1609, %v1610
        %v1612 = vand.u32 %v1611, 4294901760
        %1613 = vmatmul.mubr.f32.gmra.mrb[0].mxu0 %v1612
        %v1614 = vpop.f32.mrb[0].mxu0
        %v1615 = vadd.f32 0.0, %v1614
        %v1616 = vpop.f32.mrb[0].mxu0
        %1617 = vmatprep.mubr.f32.mxu0 0.0
        %v1618 = vand.u32 %v340, 4294901760
        %v1619 = vsub.f32 %v340, %v1618
        %v1620 = vand.u32 %v1619, 4294901760
        %v1621 = vsub.f32 %v1619, %v1620
        %v1622 = vand.u32 %v1621, 4294901760
        %1623 = vmatmul.mubr.f32.gmra.mrb[0].mxu0 %v1622
        %v1624 = vpop.f32.mrb[0].mxu0
        %v1625 = vadd.f32 0.0, %v1624
        %v1626 = vpop.f32.mrb[0].mxu0
        %1627 = vmatprep.mubr.f32.mxu0 0.0
        %v1628 = vand.u32 %v343, 4294901760
        %v1629 = vsub.f32 %v343, %v1628
        %v1630 = vand.u32 %v1629, 4294901760
        %v1631 = vsub.f32 %v1629, %v1630
        %v1632 = vand.u32 %v1631, 4294901760
        %1633 = vmatmul.mubr.f32.gmra.mrb[0].mxu0 %v1632
        %v1634 = vpop.f32.mrb[0].mxu0
        %v1635 = vadd.f32 0.0, %v1634
        %v1636 = vpop.f32.mrb[0].mxu0
        %1637 = vdwg.mxu0
        %1638 = vmatprep.subr.mxu0 0.0
        %v1639 = vand.u32 %v1529, 4294901760
        %v1640 = vsub.f32 %v1529, %v1639
        %v1641 = vand.u32 %v1640, 4294901760
        %v1642 = vsub.f32 %v1640, %v1641
        %v1643 = vand.u32 %v1642, 4294901760
        %1644 = vmatpush1.msra.mxu0 %v1643
        %1645 = vmatprep.subr.mxu0 0.0
        %v1646 = vand.u32 %v1530, 4294901760
        %v1647 = vsub.f32 %v1530, %v1646
        %v1648 = vand.u32 %v1647, 4294901760
        %v1649 = vsub.f32 %v1647, %v1648
        %v1650 = vand.u32 %v1649, 4294901760
        %1651 = vmatpush1.msra.mxu0 %v1650
        %1652 = vmatprep.subr.mxu0 0.0
        %1653 = vmatpush1.msra.mxu0 0.0
        %1654 = vmatprep.subr.mxu0 0.0
        %1655 = vmatpush1.msra.mxu0 0.0
        %1656 = vmatprep.subr.mxu0 0.0
        %1657 = vmatpush1.msra.mxu0 0.0
        %1658 = vmatprep.subr.mxu0 0.0
        %1659 = vmatpush1.msra.mxu0 0.0
        %1660 = vmatprep.subr.mxu0 0.0
        %1661 = vmatpush1.msra.mxu0 0.0
        %1662 = vmatprep.subr.mxu0 0.0
        %1663 = vmatpush1.msra.mxu0 0.0
        %1664 = vmatprep.subr.mxu0 0.0
        %1665 = vmatpush1.msra.mxu0 0.0
        %1666 = vmatprep.subr.mxu0 0.0
        %1667 = vmatpush1.msra.mxu0 0.0
        %1668 = vmatprep.subr.mxu0 0.0
        %1669 = vmatpush1.msra.mxu0 0.0
        %1670 = vmatprep.subr.mxu0 0.0
        %1671 = vmatpush1.msra.mxu0 0.0
        %1672 = vmatprep.subr.mxu0 0.0
        %1673 = vmatpush1.msra.mxu0 0.0
        %1674 = vmatprep.subr.mxu0 0.0
        %1675 = vmatpush1.msra.mxu0 0.0
        %1676 = vmatprep.subr.mxu0 0.0
        %1677 = vmatpush1.msra.mxu0 0.0
        %1678 = vmatprep.subr.mxu0 0.0
        %1679 = vmatpush1.msra.mxu0 0.0
        %1680 = vmatprep.subr.mxu0 0.0
        %1681 = vmatpush1.msra.mxu0 0.0
        %1682 = vmatprep.subr.mxu0 0.0
        %1683 = vmatpush1.msra.mxu0 0.0
        %1684 = vmatprep.subr.mxu0 0.0
        %1685 = vmatpush1.msra.mxu0 0.0
        %1686 = vmatprep.subr.mxu0 0.0
        %1687 = vmatpush1.msra.mxu0 0.0
        %1688 = vmatprep.subr.mxu0 0.0
        %1689 = vmatpush1.msra.mxu0 0.0
        %1690 = vmatprep.subr.mxu0 0.0
        %1691 = vmatpush1.msra.mxu0 0.0
        %1692 = vmatprep.subr.mxu0 0.0
        %1693 = vmatpush1.msra.mxu0 0.0
        %1694 = vmatprep.subr.mxu0 0.0
        %1695 = vmatpush1.msra.mxu0 0.0
        %1696 = vmatprep.subr.mxu0 0.0
        %1697 = vmatpush1.msra.mxu0 0.0
        %1698 = vmatprep.subr.mxu0 0.0
        %1699 = vmatpush1.msra.mxu0 0.0
        %1700 = vmatprep.subr.mxu0 0.0
        %1701 = vmatpush1.msra.mxu0 0.0
        %1702 = vmatprep.subr.mxu0 0.0
        %1703 = vmatpush1.msra.mxu0 0.0
        %1704 = vmatprep.subr.mxu0 0.0
        %1705 = vmatpush1.msra.mxu0 0.0
        %1706 = vmatprep.subr.mxu0 0.0
        %1707 = vmatpush1.msra.mxu0 0.0
        %1708 = vmatprep.subr.mxu0 0.0
        %1709 = vmatpush1.msra.mxu0 0.0
        %1710 = vmatprep.subr.mxu0 0.0
        %1711 = vmatpush1.msra.mxu0 0.0
        %1712 = vmatprep.mubr.f32.mxu0 0.0
        %v1713 = vand.u32 %v334, 4294901760
        %1714 = vmatmul.mubr.f32.gmra.mrb[0].mxu0 %v1713
        %v1715 = vpop.f32.mrb[0].mxu0
        %v1716 = vadd.f32 %v1605, %v1715
        %v1717 = vpop.f32.mrb[0].mxu0
        %1718 = vmatprep.mubr.f32.mxu0 0.0
        %v1719 = vand.u32 %v337, 4294901760
        %1720 = vmatmul.mubr.f32.gmra.mrb[0].mxu0 %v1719
        %v1721 = vpop.f32.mrb[0].mxu0
        %v1722 = vadd.f32 %v1615, %v1721
        %v1723 = vpop.f32.mrb[0].mxu0
        %1724 = vmatprep.mubr.f32.mxu0 0.0
        %v1725 = vand.u32 %v340, 4294901760
        %1726 = vmatmul.mubr.f32.gmra.mrb[0].mxu0 %v1725
        %v1727 = vpop.f32.mrb[0].mxu0
        %v1728 = vadd.f32 %v1625, %v1727
        %v1729 = vpop.f32.mrb[0].mxu0
        %1730 = vmatprep.mubr.f32.mxu0 0.0
        %v1731 = vand.u32 %v343, 4294901760
        %1732 = vmatmul.mubr.f32.gmra.mrb[0].mxu0 %v1731
        %v1733 = vpop.f32.mrb[0].mxu0
        %v1734 = vadd.f32 %v1635, %v1733
        %v1735 = vpop.f32.mrb[0].mxu0
        %1736 = vdwg.mxu0
        %1737 = vmatprep.subr.mxu0 0.0
        %v1738 = vand.u32 %v1529, 4294901760
        %v1739 = vsub.f32 %v1529, %v1738
        %1740 = vmatpush1.msra.mxu0 %v1739
        %1741 = vmatprep.subr.mxu0 0.0
        %v1742 = vand.u32 %v1530, 4294901760
        %v1743 = vsub.f32 %v1530, %v1742
        %1744 = vmatpush1.msra.mxu0 %v1743
        %1745 = vmatprep.subr.mxu0 0.0
        %1746 = vmatpush1.msra.mxu0 0.0
        %1747 = vmatprep.subr.mxu0 0.0
        %1748 = vmatpush1.msra.mxu0 0.0
        %1749 = vmatprep.subr.mxu0 0.0
        %1750 = vmatpush1.msra.mxu0 0.0
        %1751 = vmatprep.subr.mxu0 0.0
        %1752 = vmatpush1.msra.mxu0 0.0
        %1753 = vmatprep.subr.mxu0 0.0
        %1754 = vmatpush1.msra.mxu0 0.0
        %1755 = vmatprep.subr.mxu0 0.0
        %1756 = vmatpush1.msra.mxu0 0.0
        %1757 = vmatprep.subr.mxu0 0.0
        %1758 = vmatpush1.msra.mxu0 0.0
        %1759 = vmatprep.subr.mxu0 0.0
        %1760 = vmatpush1.msra.mxu0 0.0
        %1761 = vmatprep.subr.mxu0 0.0
        %1762 = vmatpush1.msra.mxu0 0.0
        %1763 = vmatprep.subr.mxu0 0.0
        %1764 = vmatpush1.msra.mxu0 0.0
        %1765 = vmatprep.subr.mxu0 0.0
        %1766 = vmatpush1.msra.mxu0 0.0
        %1767 = vmatprep.subr.mxu0 0.0
        %1768 = vmatpush1.msra.mxu0 0.0
        %1769 = vmatprep.subr.mxu0 0.0
        %1770 = vmatpush1.msra.mxu0 0.0
        %1771 = vmatprep.subr.mxu0 0.0
        %1772 = vmatpush1.msra.mxu0 0.0
        %1773 = vmatprep.subr.mxu0 0.0
        %1774 = vmatpush1.msra.mxu0 0.0
        %1775 = vmatprep.subr.mxu0 0.0
        %1776 = vmatpush1.msra.mxu0 0.0
        %1777 = vmatprep.subr.mxu0 0.0
        %1778 = vmatpush1.msra.mxu0 0.0
        %1779 = vmatprep.subr.mxu0 0.0
        %1780 = vmatpush1.msra.mxu0 0.0
        %1781 = vmatprep.subr.mxu0 0.0
        %1782 = vmatpush1.msra.mxu0 0.0
        %1783 = vmatprep.subr.mxu0 0.0
        %1784 = vmatpush1.msra.mxu0 0.0
        %1785 = vmatprep.subr.mxu0 0.0
        %1786 = vmatpush1.msra.mxu0 0.0
        %1787 = vmatprep.subr.mxu0 0.0
        %1788 = vmatpush1.msra.mxu0 0.0
        %1789 = vmatprep.subr.mxu0 0.0
        %1790 = vmatpush1.msra.mxu0 0.0
        %1791 = vmatprep.subr.mxu0 0.0
        %1792 = vmatpush1.msra.mxu0 0.0
        %1793 = vmatprep.subr.mxu0 0.0
        %1794 = vmatpush1.msra.mxu0 0.0
        %1795 = vmatprep.subr.mxu0 0.0
        %1796 = vmatpush1.msra.mxu0 0.0
        %1797 = vmatprep.subr.mxu0 0.0
        %1798 = vmatpush1.msra.mxu0 0.0
        %1799 = vmatprep.subr.mxu0 0.0
        %1800 = vmatpush1.msra.mxu0 0.0
        %1801 = vmatprep.subr.mxu0 0.0
        %1802 = vmatpush1.msra.mxu0 0.0
        %1803 = vmatprep.subr.mxu0 0.0
        %1804 = vmatpush1.msra.mxu0 0.0
        %1805 = vmatprep.mubr.f32.mxu0 0.0
        %v1806 = vand.u32 %v334, 4294901760
        %v1807 = vsub.f32 %v334, %v1806
        %1808 = vmatmul.mubr.f32.gmra.mrb[0].mxu0 %v1807
        %v1809 = vpop.f32.mrb[0].mxu0
        %v1810 = vadd.f32 %v1716, %v1809
        %v1811 = vpop.f32.mrb[0].mxu0
        %1812 = vmatprep.mubr.f32.mxu0 0.0
        %v1813 = vand.u32 %v337, 4294901760
        %v1814 = vsub.f32 %v337, %v1813
        %1815 = vmatmul.mubr.f32.gmra.mrb[0].mxu0 %v1814
        %v1816 = vpop.f32.mrb[0].mxu0
        %v1817 = vadd.f32 %v1722, %v1816
        %v1818 = vpop.f32.mrb[0].mxu0
        %1819 = vmatprep.mubr.f32.mxu0 0.0
        %v1820 = vand.u32 %v340, 4294901760
        %v1821 = vsub.f32 %v340, %v1820
        %1822 = vmatmul.mubr.f32.gmra.mrb[0].mxu0 %v1821
        %v1823 = vpop.f32.mrb[0].mxu0
        %v1824 = vadd.f32 %v1728, %v1823
        %v1825 = vpop.f32.mrb[0].mxu0
        %1826 = vmatprep.mubr.f32.mxu0 0.0
        %v1827 = vand.u32 %v343, 4294901760
        %v1828 = vsub.f32 %v343, %v1827
        %1829 = vmatmul.mubr.f32.gmra.mrb[0].mxu0 %v1828
        %v1830 = vpop.f32.mrb[0].mxu0
        %v1831 = vadd.f32 %v1734, %v1830
        %v1832 = vpop.f32.mrb[0].mxu0
        %1833 = vdwg.mxu0
        %1834 = vmatprep.subr.mxu0 0.0
        %v1835 = vand.u32 %v1529, 4294901760
        %1836 = vmatpush1.msra.mxu0 %v1835
        %1837 = vmatprep.subr.mxu0 0.0
        %v1838 = vand.u32 %v1530, 4294901760
        %1839 = vmatpush1.msra.mxu0 %v1838
        %1840 = vmatprep.subr.mxu0 0.0
        %1841 = vmatpush1.msra.mxu0 0.0
        %1842 = vmatprep.subr.mxu0 0.0
        %1843 = vmatpush1.msra.mxu0 0.0
        %1844 = vmatprep.subr.mxu0 0.0
        %1845 = vmatpush1.msra.mxu0 0.0
        %1846 = vmatprep.subr.mxu0 0.0
        %1847 = vmatpush1.msra.mxu0 0.0
        %1848 = vmatprep.subr.mxu0 0.0
        %1849 = vmatpush1.msra.mxu0 0.0
        %1850 = vmatprep.subr.mxu0 0.0
        %1851 = vmatpush1.msra.mxu0 0.0
        %1852 = vmatprep.subr.mxu0 0.0
        %1853 = vmatpush1.msra.mxu0 0.0
        %1854 = vmatprep.subr.mxu0 0.0
        %1855 = vmatpush1.msra.mxu0 0.0
        %1856 = vmatprep.subr.mxu0 0.0
        %1857 = vmatpush1.msra.mxu0 0.0
        %1858 = vmatprep.subr.mxu0 0.0
        %1859 = vmatpush1.msra.mxu0 0.0
        %1860 = vmatprep.subr.mxu0 0.0
        %1861 = vmatpush1.msra.mxu0 0.0
        %1862 = vmatprep.subr.mxu0 0.0
        %1863 = vmatpush1.msra.mxu0 0.0
        %1864 = vmatprep.subr.mxu0 0.0
        %1865 = vmatpush1.msra.mxu0 0.0
        %1866 = vmatprep.subr.mxu0 0.0
        %1867 = vmatpush1.msra.mxu0 0.0
        %1868 = vmatprep.subr.mxu0 0.0
        %1869 = vmatpush1.msra.mxu0 0.0
        %1870 = vmatprep.subr.mxu0 0.0
        %1871 = vmatpush1.msra.mxu0 0.0
        %1872 = vmatprep.subr.mxu0 0.0
        %1873 = vmatpush1.msra.mxu0 0.0
        %1874 = vmatprep.subr.mxu0 0.0
        %1875 = vmatpush1.msra.mxu0 0.0
        %1876 = vmatprep.subr.mxu0 0.0
        %1877 = vmatpush1.msra.mxu0 0.0
        %1878 = vmatprep.subr.mxu0 0.0
        %1879 = vmatpush1.msra.mxu0 0.0
        %1880 = vmatprep.subr.mxu0 0.0
        %1881 = vmatpush1.msra.mxu0 0.0
        %1882 = vmatprep.subr.mxu0 0.0
        %1883 = vmatpush1.msra.mxu0 0.0
        %1884 = vmatprep.subr.mxu0 0.0
        %1885 = vmatpush1.msra.mxu0 0.0
        %1886 = vmatprep.subr.mxu0 0.0
        %1887 = vmatpush1.msra.mxu0 0.0
        %1888 = vmatprep.subr.mxu0 0.0
        %1889 = vmatpush1.msra.mxu0 0.0
        %1890 = vmatprep.subr.mxu0 0.0
        %1891 = vmatpush1.msra.mxu0 0.0
        %1892 = vmatprep.subr.mxu0 0.0
        %1893 = vmatpush1.msra.mxu0 0.0
        %1894 = vmatprep.subr.mxu0 0.0
        %1895 = vmatpush1.msra.mxu0 0.0
        %1896 = vmatprep.subr.mxu0 0.0
        %1897 = vmatpush1.msra.mxu0 0.0
        %1898 = vmatprep.subr.mxu0 0.0
        %1899 = vmatpush1.msra.mxu0 0.0
        %1900 = vmatprep.mubr.f32.mxu0 0.0
        %v1901 = vand.u32 %v334, 4294901760
        %v1902 = vsub.f32 %v334, %v1901
        %v1903 = vand.u32 %v1902, 4294901760
        %1904 = vmatmul.mubr.f32.gmra.mrb[0].mxu0 %v1903
        %v1905 = vpop.f32.mrb[0].mxu0
        %v1906 = vadd.f32 %v1810, %v1905
        %v1907 = vpop.f32.mrb[0].mxu0
        %1908 = vmatprep.mubr.f32.mxu0 0.0
        %v1909 = vand.u32 %v337, 4294901760
        %v1910 = vsub.f32 %v337, %v1909
        %v1911 = vand.u32 %v1910, 4294901760
        %1912 = vmatmul.mubr.f32.gmra.mrb[0].mxu0 %v1911
        %v1913 = vpop.f32.mrb[0].mxu0
        %v1914 = vadd.f32 %v1817, %v1913
        %v1915 = vpop.f32.mrb[0].mxu0
        %1916 = vmatprep.mubr.f32.mxu0 0.0
        %v1917 = vand.u32 %v340, 4294901760
        %v1918 = vsub.f32 %v340, %v1917
        %v1919 = vand.u32 %v1918, 4294901760
        %1920 = vmatmul.mubr.f32.gmra.mrb[0].mxu0 %v1919
        %v1921 = vpop.f32.mrb[0].mxu0
        %v1922 = vadd.f32 %v1824, %v1921
        %v1923 = vpop.f32.mrb[0].mxu0
        %1924 = vmatprep.mubr.f32.mxu0 0.0
        %v1925 = vand.u32 %v343, 4294901760
        %v1926 = vsub.f32 %v343, %v1925
        %v1927 = vand.u32 %v1926, 4294901760
        %1928 = vmatmul.mubr.f32.gmra.mrb[0].mxu0 %v1927
        %v1929 = vpop.f32.mrb[0].mxu0
        %v1930 = vadd.f32 %v1831, %v1929
        %v1931 = vpop.f32.mrb[0].mxu0
        %1932 = vdwg.mxu0
        %1933 = vmatprep.subr.mxu0 0.0
        %v1934 = vand.u32 %v1529, 4294901760
        %v1935 = vsub.f32 %v1529, %v1934
        %v1936 = vand.u32 %v1935, 4294901760
        %1937 = vmatpush1.msra.mxu0 %v1936
        %1938 = vmatprep.subr.mxu0 0.0
        %v1939 = vand.u32 %v1530, 4294901760
        %v1940 = vsub.f32 %v1530, %v1939
        %v1941 = vand.u32 %v1940, 4294901760
        %1942 = vmatpush1.msra.mxu0 %v1941
        %1943 = vmatprep.subr.mxu0 0.0
        %1944 = vmatpush1.msra.mxu0 0.0
        %1945 = vmatprep.subr.mxu0 0.0
        %1946 = vmatpush1.msra.mxu0 0.0
        %1947 = vmatprep.subr.mxu0 0.0
        %1948 = vmatpush1.msra.mxu0 0.0
        %1949 = vmatprep.subr.mxu0 0.0
        %1950 = vmatpush1.msra.mxu0 0.0
        %1951 = vmatprep.subr.mxu0 0.0
        %1952 = vmatpush1.msra.mxu0 0.0
        %1953 = vmatprep.subr.mxu0 0.0
        %1954 = vmatpush1.msra.mxu0 0.0
        %1955 = vmatprep.subr.mxu0 0.0
        %1956 = vmatpush1.msra.mxu0 0.0
        %1957 = vmatprep.subr.mxu0 0.0
        %1958 = vmatpush1.msra.mxu0 0.0
        %1959 = vmatprep.subr.mxu0 0.0
        %1960 = vmatpush1.msra.mxu0 0.0
        %1961 = vmatprep.subr.mxu0 0.0
        %1962 = vmatpush1.msra.mxu0 0.0
        %1963 = vmatprep.subr.mxu0 0.0
        %1964 = vmatpush1.msra.mxu0 0.0
        %1965 = vmatprep.subr.mxu0 0.0
        %1966 = vmatpush1.msra.mxu0 0.0
        %1967 = vmatprep.subr.mxu0 0.0
        %1968 = vmatpush1.msra.mxu0 0.0
        %1969 = vmatprep.subr.mxu0 0.0
        %1970 = vmatpush1.msra.mxu0 0.0
        %1971 = vmatprep.subr.mxu0 0.0
        %1972 = vmatpush1.msra.mxu0 0.0
        %1973 = vmatprep.subr.mxu0 0.0
        %1974 = vmatpush1.msra.mxu0 0.0
        %1975 = vmatprep.subr.mxu0 0.0
        %1976 = vmatpush1.msra.mxu0 0.0
        %1977 = vmatprep.subr.mxu0 0.0
        %1978 = vmatpush1.msra.mxu0 0.0
        %1979 = vmatprep.subr.mxu0 0.0
        %1980 = vmatpush1.msra.mxu0 0.0
        %1981 = vmatprep.subr.mxu0 0.0
        %1982 = vmatpush1.msra.mxu0 0.0
        %1983 = vmatprep.subr.mxu0 0.0
        %1984 = vmatpush1.msra.mxu0 0.0
        %1985 = vmatprep.subr.mxu0 0.0
        %1986 = vmatpush1.msra.mxu0 0.0
        %1987 = vmatprep.subr.mxu0 0.0
        %1988 = vmatpush1.msra.mxu0 0.0
        %1989 = vmatprep.subr.mxu0 0.0
        %1990 = vmatpush1.msra.mxu0 0.0
        %1991 = vmatprep.subr.mxu0 0.0
        %1992 = vmatpush1.msra.mxu0 0.0
        %1993 = vmatprep.subr.mxu0 0.0
        %1994 = vmatpush1.msra.mxu0 0.0
        %1995 = vmatprep.subr.mxu0 0.0
        %1996 = vmatpush1.msra.mxu0 0.0
        %1997 = vmatprep.subr.mxu0 0.0
        %1998 = vmatpush1.msra.mxu0 0.0
        %1999 = vmatprep.subr.mxu0 0.0
        %2000 = vmatpush1.msra.mxu0 0.0
        %2001 = vmatprep.subr.mxu0 0.0
        %2002 = vmatpush1.msra.mxu0 0.0
        %2003 = vmatprep.mubr.f32.mxu0 0.0
        %v2004 = vand.u32 %v334, 4294901760
        %2005 = vmatmul.mubr.f32.gmra.mrb[0].mxu0 %v2004
        %v2006 = vpop.f32.mrb[0].mxu0
        %v2007 = vadd.f32 %v1906, %v2006
        %v2008 = vpop.f32.mrb[0].mxu0
        %2009 = vmatprep.mubr.f32.mxu0 0.0
        %v2010 = vand.u32 %v337, 4294901760
        %2011 = vmatmul.mubr.f32.gmra.mrb[0].mxu0 %v2010
        %v2012 = vpop.f32.mrb[0].mxu0
        %v2013 = vadd.f32 %v1914, %v2012
        %v2014 = vpop.f32.mrb[0].mxu0
        %2015 = vmatprep.mubr.f32.mxu0 0.0
        %v2016 = vand.u32 %v340, 4294901760
        %2017 = vmatmul.mubr.f32.gmra.mrb[0].mxu0 %v2016
        %v2018 = vpop.f32.mrb[0].mxu0
        %v2019 = vadd.f32 %v1922, %v2018
        %v2020 = vpop.f32.mrb[0].mxu0
        %2021 = vmatprep.mubr.f32.mxu0 0.0
        %v2022 = vand.u32 %v343, 4294901760
        %2023 = vmatmul.mubr.f32.gmra.mrb[0].mxu0 %v2022
        %v2024 = vpop.f32.mrb[0].mxu0
        %v2025 = vadd.f32 %v1930, %v2024
        %v2026 = vpop.f32.mrb[0].mxu0
        %2027 = vdwg.mxu0
        %2028 = vmatprep.subr.mxu0 0.0
        %v2029 = vand.u32 %v1529, 4294901760
        %2030 = vmatpush1.msra.mxu0 %v2029
        %2031 = vmatprep.subr.mxu0 0.0
        %v2032 = vand.u32 %v1530, 4294901760
        %2033 = vmatpush1.msra.mxu0 %v2032
        %2034 = vmatprep.subr.mxu0 0.0
        %2035 = vmatpush1.msra.mxu0 0.0
        %2036 = vmatprep.subr.mxu0 0.0
        %2037 = vmatpush1.msra.mxu0 0.0
        %2038 = vmatprep.subr.mxu0 0.0
        %2039 = vmatpush1.msra.mxu0 0.0
        %2040 = vmatprep.subr.mxu0 0.0
        %2041 = vmatpush1.msra.mxu0 0.0
        %2042 = vmatprep.subr.mxu0 0.0
        %2043 = vmatpush1.msra.mxu0 0.0
        %2044 = vmatprep.subr.mxu0 0.0
        %2045 = vmatpush1.msra.mxu0 0.0
        %2046 = vmatprep.subr.mxu0 0.0
        %2047 = vmatpush1.msra.mxu0 0.0
        %2048 = vmatprep.subr.mxu0 0.0
        %2049 = vmatpush1.msra.mxu0 0.0
        %2050 = vmatprep.subr.mxu0 0.0
        %2051 = vmatpush1.msra.mxu0 0.0
        %2052 = vmatprep.subr.mxu0 0.0
        %2053 = vmatpush1.msra.mxu0 0.0
        %2054 = vmatprep.subr.mxu0 0.0
        %2055 = vmatpush1.msra.mxu0 0.0
        %2056 = vmatprep.subr.mxu0 0.0
        %2057 = vmatpush1.msra.mxu0 0.0
        %2058 = vmatprep.subr.mxu0 0.0
        %2059 = vmatpush1.msra.mxu0 0.0
        %2060 = vmatprep.subr.mxu0 0.0
        %2061 = vmatpush1.msra.mxu0 0.0
        %2062 = vmatprep.subr.mxu0 0.0
        %2063 = vmatpush1.msra.mxu0 0.0
        %2064 = vmatprep.subr.mxu0 0.0
        %2065 = vmatpush1.msra.mxu0 0.0
        %2066 = vmatprep.subr.mxu0 0.0
        %2067 = vmatpush1.msra.mxu0 0.0
        %2068 = vmatprep.subr.mxu0 0.0
        %2069 = vmatpush1.msra.mxu0 0.0
        %2070 = vmatprep.subr.mxu0 0.0
        %2071 = vmatpush1.msra.mxu0 0.0
        %2072 = vmatprep.subr.mxu0 0.0
        %2073 = vmatpush1.msra.mxu0 0.0
        %2074 = vmatprep.subr.mxu0 0.0
        %2075 = vmatpush1.msra.mxu0 0.0
        %2076 = vmatprep.subr.mxu0 0.0
        %2077 = vmatpush1.msra.mxu0 0.0
        %2078 = vmatprep.subr.mxu0 0.0
        %2079 = vmatpush1.msra.mxu0 0.0
        %2080 = vmatprep.subr.mxu0 0.0
        %2081 = vmatpush1.msra.mxu0 0.0
        %2082 = vmatprep.subr.mxu0 0.0
        %2083 = vmatpush1.msra.mxu0 0.0
        %2084 = vmatprep.subr.mxu0 0.0
        %2085 = vmatpush1.msra.mxu0 0.0
        %2086 = vmatprep.subr.mxu0 0.0
        %2087 = vmatpush1.msra.mxu0 0.0
        %2088 = vmatprep.subr.mxu0 0.0
        %2089 = vmatpush1.msra.mxu0 0.0
        %2090 = vmatprep.subr.mxu0 0.0
        %2091 = vmatpush1.msra.mxu0 0.0
        %2092 = vmatprep.subr.mxu0 0.0
        %2093 = vmatpush1.msra.mxu0 0.0
        %2094 = vmatprep.mubr.f32.mxu0 0.0
        %v2095 = vand.u32 %v334, 4294901760
        %2096 = vmatmul.mubr.f32.gmra.mrb[0].mxu0 %v2095
        %v2097 = vpop.f32.mrb[0].mxu0
        %v2098 = vadd.f32 %v2007, %v2097
        %v2099 = vpop.f32.mrb[0].mxu0
        %2100 = vmatprep.mubr.f32.mxu0 0.0
        %v2101 = vand.u32 %v337, 4294901760
        %2102 = vmatmul.mubr.f32.gmra.mrb[0].mxu0 %v2101
        %v2103 = vpop.f32.mrb[0].mxu0
        %v2104 = vadd.f32 %v2013, %v2103
        %v2105 = vpop.f32.mrb[0].mxu0
        %2106 = vmatprep.mubr.f32.mxu0 0.0
        %v2107 = vand.u32 %v340, 4294901760
        %2108 = vmatmul.mubr.f32.gmra.mrb[0].mxu0 %v2107
        %v2109 = vpop.f32.mrb[0].mxu0
        %v2110 = vadd.f32 %v2019, %v2109
        %v2111 = vpop.f32.mrb[0].mxu0
        %2112 = vmatprep.mubr.f32.mxu0 0.0
        %v2113 = vand.u32 %v343, 4294901760
        %2114 = vmatmul.mubr.f32.gmra.mrb[0].mxu0 %v2113
        %v2115 = vpop.f32.mrb[0].mxu0
        %v2116 = vadd.f32 %v2025, %v2115
        %v2117 = vpop.f32.mrb[0].mxu0
        %2118 = vdwg.mxu0
        %v2119 = vmax.f32 %v1524, %v2098
        %v2120 = vmax.f32 %v1525, %v2104
        %v2121 = vmax.f32 %v1526, %v2110
        %v2122 = vmax.f32 %v1527, %v2116
        %vm2123 = vcmask 46080
        %2124 = vst.msk [vmem:[%s245] sm:$0x3f] %vm2123, %v2119
        %2125 = vst.msk [vmem:[%s245 + $0x8] sm:$0x3f] %vm2123, %v2120
        %2126 = vst.msk [vmem:[%s245 + $0x10] sm:$0x3f] %vm2123, %v2121
        %2127 = vst.msk [vmem:[%s245 + $0x18] sm:$0x3f] %vm2123, %v2122
        %vm2128 = vcmask 36864
        %2129 = vst.msk [vmem:[%s254] sm:$0x1f] %vm2128, %v2119
        %2130 = vst.msk [vmem:[%s254 + $0x8] sm:$0x1f] %vm2128, %v2120
        %2131 = vst.msk [vmem:[%s254 + $0x10] sm:$0x1f] %vm2128, %v2121
        %2132 = vst.msk [vmem:[%s254 + $0x18] sm:$0x1f] %vm2128, %v2122
        %s2133 = smul.u32 4, %s23
        %p2134 = scmp.lt.s32.totalorder %s2133, 7
        %s2135 = scalar_select %p2134, %s2133, 7
        %p2136 = scmp.lt.s32.totalorder %s24, 0
        %s2137 = scalar_select %p2136, %s24, 0
        %s2138 = sadd.s32 %s2137, %s2135
        %s2139 = smul.addr %s2138, 8
        %s2140 = scalar_lea.vmem %s2, %s2139
        %s2141 = smul.u32 4, %s23
        %p2142 = scmp.lt.s32.totalorder %s2141, 7
        %s2143 = scalar_select %p2142, %s2141, 7
        %p2144 = scmp.lt.s32.totalorder %s24, 0
        %s2145 = scalar_select %p2144, %s24, 0
        %s2146 = sadd.s32 %s2145, %s2143
        %s2147 = smul.addr %s2146, 8
        %s2148 = scalar_lea.vmem %s3, %s2147
        // Predicated region
        $region37: #{maxpool2d_both.1} parent=27 // pred_check
          %p2149 = pneg %p100
        $region38: #{maxpool2d_both.1} parent=27 // pred_check_branch
          %2151 = sbr.rel (%p2149) target = $region40
        $region39: #{maxpool2d_both.1} parent=27 // pred_region
          %s2152 = smul.u32 4, %s23
        $region40: #{maxpool2d_both.1} parent=27 // pred_fallthru
          _
        // Predicated region
        $region41: #{maxpool2d_both.1} parent=27 // pred_check
          %p2153 = pneg %p128
        $region42: #{maxpool2d_both.1} parent=27 // pred_check_branch
          %2155 = sbr.rel (%p2153) target = $region44
        $region43: #{maxpool2d_both.1} parent=27 // pred_region
          %s2156 = smul.u32 4, %s23
        $region44: #{maxpool2d_both.1} parent=27 // pred_fallthru
          _
      $region28: #{maxpool2d_both.1} parent=5 // pred_fallthru
        _
      %p2157 = scmp.le.s32.totalorder 2, %s14
      // Predicated region
      $region45: #{maxpool2d_both.1} parent=5 // pred_check
        %p2158 = pneg %p2157
      $region46: #{maxpool2d_both.1} parent=5 // pred_check_branch
        %2160 = sbr.rel (%p2158) target = $region48
      $region47: #{maxpool2d_both.1} parent=5 // pred_region
        %s2161 = ssub.s32 %s14, 2
        // Predicated region
        $region49: #{maxpool2d_both.1} parent=47 // pred_check
          %p2162 = pneg %p106
        $region50: #{maxpool2d_both.1} parent=47 // pred_check_branch
          %2164 = sbr.rel (%p2162) target = $region52
        $region51: #{maxpool2d_both.1} parent=47 // pred_region
          %s2165 = smul.u32 4, %s25
          %p2166 = scmp.lt.s32.totalorder %s2165, 7
          %s2167 = scalar_select %p2166, %s2165, 7
          %p2168 = scmp.lt.s32.totalorder %s26, 0
          %s2169 = scalar_select %p2168, %s26, 0
          %s2170 = sadd.s32 %s2169, %s2167
          %s2171 = smul.addr %s2170, 8
          %s2172 = scalar_lea.vmem %s2, %s2171
        $region52: #{maxpool2d_both.1} parent=47 // pred_fallthru
          _
        // Predicated region
        $region53: #{maxpool2d_both.1} parent=47 // pred_check
          %p2173 = pneg %p134
        $region54: #{maxpool2d_both.1} parent=47 // pred_check_branch
          %2175 = sbr.rel (%p2173) target = $region56
        $region55: #{maxpool2d_both.1} parent=47 // pred_region
          %s2176 = smul.u32 4, %s25
          %p2177 = scmp.lt.s32.totalorder %s2176, 7
          %s2178 = scalar_select %p2177, %s2176, 7
          %p2179 = scmp.lt.s32.totalorder %s26, 0
          %s2180 = scalar_select %p2179, %s26, 0
          %s2181 = sadd.s32 %s2180, %s2178
          %s2182 = smul.addr %s2181, 8
          %s2183 = scalar_lea.vmem %s3, %s2182
        $region56: #{maxpool2d_both.1} parent=47 // pred_fallthru
          _
      $region48: #{maxpool2d_both.1} parent=5 // pred_fallthru
        _
    $region6: #{maxpool2d_both.1} parent=1 // loop_footer
      %s18 = sadd.s32 1, %s14
    $region7: #{maxpool2d_both.1} parent=1 // loop_footer_branch
      %13 = sbr.rel target = $region3
    $region8: #{maxpool2d_both.1} parent=1 // loop_exit
      _
    %2184 = vsyncpa [#allocation3], 1
    %s2185 = scalar_lea.sflag [#allocation3], 1
    %2186 = vsyncpa %s2185, 1
    %2187 = vsyncpa [#allocation5], 1
    %s2188 = scalar_lea.sflag [#allocation5], 1
    %2189 = vsyncpa %s2188, 1

</llo_original>
